<compile_context>
chip_gen: v6e
topology: v6e:2x2x1
jax: 0.10.0
libtpu: 0.0.40
codegen_flags: <defaults>
</compile_context>

<pallas_src>
import functools
import math

import jax
import jax.numpy as jnp
import numpy as np
from jax.experimental import pallas as pl
from jax.experimental.pallas import tpu as pltpu


def _encoder_layer_kernel(
    x_full_ref,     # (1, S, D)    full sequence rows (K/V source)
    x_q_ref,        # (1, tq, D)   query-tile rows (Q + residual)
    bias_ref,       # (1, 1, S)    additive key-padding bias (0 / -1e9)
    ln_ref,         # (4, D)       rows = [gamma1, beta1, gamma2, beta2]
    wqkv_ref,       # (3, 1, D, dk) this head's Q/K/V weights (Q pre-scaled)
    bqkv_ref,       # (3, 1, 1, dk) this head's Q/K/V biases  (Q pre-scaled)
    wo_ref,         # (1, dk, D)    this head's output-projection slab
    bo_ref,         # (1, D)
    w1_ref, b1_ref,  # (D, Dff), (1, Dff)
    w2_ref, b2_ref,  # (Dff, D), (1, D)
    o_ref,          # (1, tq, D)
    *scratch,
    eps, matmul_dtype, approx_recip, cache_kv,
):
    if cache_kv:
        k_cache, v_cache, acc_ref = scratch
    else:
        (acc_ref,) = scratch

    qi = pl.program_id(1)
    h = pl.program_id(2)
    n_heads = pl.num_programs(2)

    x_q = x_q_ref[0]                         # (tq, D) f32
    bias = bias_ref[0]                       # (1, S)
    D = x_q.shape[-1]

    g1, be1 = ln_ref[0:1, :], ln_ref[1:2, :]
    g2, be2 = ln_ref[2:3, :], ln_ref[3:4, :]

    def layer_norm(v, gamma, beta):
        # One pass: mean and E[x^2] from the same load; unbiased variance as in
        # torch.std, clamped at 0 against catastrophic cancellation.
        s1 = jnp.sum(v, axis=-1, keepdims=True)
        s2 = jnp.sum(v * v, axis=-1, keepdims=True)
        mean = s1 * (1.0 / D)
        var = jnp.maximum((s2 - s1 * mean) * (1.0 / (D - 1)), 0.0)
        inv = 1.0 / (jnp.sqrt(var) + eps)    # (std + eps), NOT sqrt(var + eps)
        return gamma * ((v - mean) * inv) + beta

    def mm(a, b):   # 2-D MXU dot, bf16/f32 inputs, always f32 accumulation
        return jnp.dot(a.astype(matmul_dtype), b.astype(matmul_dtype),
                       preferred_element_type=jnp.float32)

    wq, wk, wv = wqkv_ref[0, 0], wqkv_ref[1, 0], wqkv_ref[2, 0]   # (D, dk)
    bq, bk, bv = bqkv_ref[0, 0], bqkv_ref[1, 0], bqkv_ref[2, 0]   # (1, dk)

    @pl.when(h == 0)
    def _init_acc():
        acc_ref[...] = jnp.zeros(acc_ref.shape, acc_ref.dtype)

    # ---- this head's K / V over the full sequence ---------------------------
    if cache_kv:
        @pl.when(qi == 0)                   # fill once per (batch, head)
        def _fill_kv():
            xn_full = layer_norm(x_full_ref[0], g1, be1)
            k_cache[h] = (mm(xn_full, wk) + bk).astype(k_cache.dtype)
            v_cache[h] = (mm(xn_full, wv) + bv).astype(v_cache.dtype)
        k = k_cache[h]                       # (S, dk)
        v = v_cache[h]
    else:
        xn_full = layer_norm(x_full_ref[0], g1, be1)
        k = mm(xn_full, wk) + bk
        v = mm(xn_full, wv) + bv

    # ---- sublayer 1: this head's attention panel for the q-tile -------------
    xn_q = layer_norm(x_q, g1, be1)
    q = mm(xn_q, wq) + bq                    # (tq, dk); 1/sqrt(dk) pre-folded

    s = jax.lax.dot_general(q.astype(matmul_dtype), k.astype(matmul_dtype),
                            (((1,), (1,)), ((), ())),
                            preferred_element_type=jnp.float32)   # (tq, S)
    s = s + bias
    s = s - jnp.max(s, axis=-1, keepdims=True)
    p = jnp.exp(s)
    denom = jnp.sum(p, axis=-1, keepdims=True)
    if approx_recip:
        p = p * pl.reciprocal(denom, approx=True)   # EUP slot, off the VALU
    else:
        p = p / denom

    ctx = mm(p, v)                                  # (tq, dk)
    acc_ref[...] += mm(ctx, wo_ref[0])              # fold head into (tq, D)

    # ---- last head: residual + FFN sublayer, store the q-tile ---------------
    @pl.when(h == n_heads - 1)
    def _finish():
        y1 = x_q + acc_ref[...] + bo_ref[...]       # dropout == identity (eval)
        y1n = layer_norm(y1, g2, be2)
        hid = jnp.maximum(mm(y1n, w1_ref[...]) + b1_ref[...], 0.0)
        ffn = mm(hid, w2_ref[...]) + b2_ref[...]
        o_ref[0] = (y1 + ffn).astype(o_ref.dtype)


def _pick_q_tile(S, requested):
    if requested is not None:
        if S % requested != 0 or (requested != S and requested % 8 != 0):
            raise ValueError(f"q_tile={requested} must divide S={S} and be a "
                             f"multiple of 8 (or equal S)")
        return requested
    for cand in (256, 128, 64, 32, 16, 8):
        if S % cand == 0:
            return cand
    return S


def _vmem_limit_bytes():
    # v5e/v6e: 128 MiB physical VMEM (scoped defaults of 16/32 MiB are too
    # small); v7x: 64 MiB physical, so cap around 48 MiB and keep headroom.
    try:
        phys = int(pltpu.get_tpu_info().vmem_capacity_bytes)
    except Exception:
        phys = 64 * 1024 * 1024             # conservative (v7x-sized) fallback
    return int(min(96 * 1024 * 1024, (phys * 3) // 4))


def encoder_layer(x, mask, params, *, n_heads=4, eps=1e-6, q_tile=None,
                  matmul_dtype=jnp.bfloat16, approx_softmax=True, cache_kv=True):
    """x: (B, S, D) float32.  mask: (B, 1, S) key-padding mask, 1 = attend, 0 = masked.

    Default is the bf16 MXU fast path (f32 accumulation, approx reciprocal).
    Pass matmul_dtype=jnp.float32, approx_softmax=False for the exact path.
    """
    B, S, D = x.shape
    assert D % n_heads == 0
    dk = D // n_heads
    Dff = params["w1"].shape[1]

    q_tile = _pick_q_tile(S, q_tile)
    nq = S // q_tile

    # ---- one-time host-side parameter packing (head-major weights) ----
    scale = 1.0 / math.sqrt(dk)

    def heads_w(w):                          # (D, D) -> (H, D, dk)
        return w.reshape(D, n_heads, dk).transpose(1, 0, 2)

    def heads_b(b):                          # (1, D) -> (H, 1, dk)
        return b.reshape(n_heads, dk)[:, None, :]

    wqkv = jnp.stack([heads_w(params["wq"]) * scale,     # 1/sqrt(dk) folded in
                      heads_w(params["wk"]),
                      heads_w(params["wv"])], axis=0)    # (3, H, D, dk)
    bqkv = jnp.stack([heads_b(params["bq"]) * scale,
                      heads_b(params["bk"]),
                      heads_b(params["bv"])], axis=0)    # (3, H, 1, dk)
    woh = params["wo"].reshape(n_heads, dk, D)           # (H, dk, D)
    ln = jnp.concatenate([params["g1"], params["be1"],
                          params["g2"], params["be2"]], axis=0)   # (4, D)
    w1, w2 = params["w1"], params["w2"]
    bo, b1, b2 = params["bo"], params["b1"], params["b2"]

    if matmul_dtype != jnp.float32:          # ship weights in the MXU dtype
        wqkv = wqkv.astype(matmul_dtype)
        woh = woh.astype(matmul_dtype)
        w1 = w1.astype(matmul_dtype)
        w2 = w2.astype(matmul_dtype)

    # Additive attention bias from the key-padding mask (0 keep / -1e9 masked).
    attn_bias = jnp.where(mask == 0, -1e9, 0.0).astype(jnp.float32)   # (B, 1, S)

    inputs = [x, x, attn_bias, ln, wqkv, bqkv, woh, bo, w1, b1, w2, b2]

    def rep(arr):                            # replicated across the whole grid
        zeros = (0,) * arr.ndim
        # TODO(synk): single-buffer these (pipeline_mode=pl.Buffered(1)) once validated.
        return pl.BlockSpec(arr.shape, lambda b, t, h, _z=zeros: _z)

    in_specs = [
        pl.BlockSpec((1, S, D), lambda b, t, h: (b, 0, 0)),          # x, full rows
        pl.BlockSpec((1, q_tile, D), lambda b, t, h: (b, t, 0)),     # x, q-tile rows
        pl.BlockSpec((1, 1, S), lambda b, t, h: (b, 0, 0)),          # mask bias
        rep(ln),
        pl.BlockSpec((3, 1, D, dk), lambda b, t, h: (0, h, 0, 0)),   # head-h QKV W
        pl.BlockSpec((3, 1, 1, dk), lambda b, t, h: (0, h, 0, 0)),   # head-h QKV b
        pl.BlockSpec((1, dk, D), lambda b, t, h: (h, 0, 0)),         # head-h Wo slab
        rep(bo), rep(w1), rep(b1), rep(w2), rep(b2),
    ]
    out_spec = pl.BlockSpec((1, q_tile, D), lambda b, t, h: (b, t, 0))

    scratch_shapes = []
    if cache_kv:
        scratch_shapes += [pltpu.VMEM((n_heads, S, dk), matmul_dtype),   # K cache
                           pltpu.VMEM((n_heads, S, dk), matmul_dtype)]   # V cache
    scratch_shapes.append(pltpu.VMEM((q_tile, D), jnp.float32))          # attn acc

    # With the K/V cache the q-tile axis must run in order on a core, so only
    # the batch axis is "parallel"; without caching both are parallel (>= 2
    # parallel steps for v7x's two TensorCores even at B = 1).
    dims = (("parallel", "arbitrary", "arbitrary") if cache_kv
            else ("parallel", "parallel", "arbitrary"))

    kv_proj = (1 if cache_kv else nq) * 4 * S * D * D
    flops = B * (kv_proj + 4 * S * D * D + 4 * S * S * D + 4 * S * D * Dff)
    transcendentals = B * n_heads * S * S
    bytes_accessed = int(sum(int(a.size) * a.dtype.itemsize for a in inputs)
                         + int(x.size) * x.dtype.itemsize)

    kernel = functools.partial(
        _encoder_layer_kernel, eps=eps, matmul_dtype=matmul_dtype,
        approx_recip=approx_softmax, cache_kv=cache_kv)

    return pl.pallas_call(
        kernel,
        out_shape=jax.ShapeDtypeStruct((B, S, D), x.dtype),
        grid=(B, nq, n_heads),
        in_specs=in_specs,
        out_specs=out_spec,
        scratch_shapes=scratch_shapes,
        compiler_params=pltpu.CompilerParams(
            dimension_semantics=dims,
            vmem_limit_bytes=_vmem_limit_bytes(),
        ),
        cost_estimate=pl.CostEstimate(
            flops=int(flops),
            transcendentals=int(transcendentals),
            bytes_accessed=bytes_accessed,
        ),
    )(*inputs)


def _reference(x, mask, params, *, n_heads=4, eps=1e-6):
    """Pure-JAX reference mirroring the PyTorch forward pass (f32 throughout)."""
    B, S, D = x.shape
    dk = D // n_heads

    def layer_norm(v, g, b):
        mean = jnp.mean(v, axis=-1, keepdims=True)
        var = jnp.sum((v - mean) ** 2, axis=-1, keepdims=True) / (D - 1)
        return g * (v - mean) / (jnp.sqrt(var) + eps) + b

    xn = layer_norm(x, params["g1"], params["be1"])
    q = xn @ params["wq"] + params["bq"]
    k = xn @ params["wk"] + params["bk"]
    v = xn @ params["wv"] + params["bv"]

    def split(t):  # (B, S, D) -> (B, H, S, dk)
        return t.reshape(B, S, n_heads, dk).transpose(0, 2, 1, 3)

    qh, kh, vh = split(q), split(k), split(v)
    s = jnp.einsum("bhqd,bhkd->bhqk", qh, kh) / math.sqrt(dk)
    s = jnp.where(mask[:, None, :, :] == 0, -1e9, s)      # (B,1,1,S) broadcast
    p = jax.nn.softmax(s, axis=-1)
    attn = jnp.einsum("bhqk,bhkd->bhqd", p, vh).transpose(0, 2, 1, 3).reshape(B, S, D)
    attn = attn @ params["wo"] + params["bo"]
    y1 = x + attn

    y1n = layer_norm(y1, params["g2"], params["be2"])
    ffn = jnp.maximum(y1n @ params["w1"] + params["b1"], 0.0) @ params["w2"] + params["b2"]
    return y1 + ffn


if __name__ == "__main__":
    B, S, D, Dff, H = 2, 16, 32, 64, 4

    key = jax.random.PRNGKey(0)
    ks = jax.random.split(key, 13)

    params = {
        "g1": jnp.ones((1, D), jnp.float32),
        "be1": jnp.zeros((1, D), jnp.float32),
        "wq": 0.1 * jax.random.normal(ks[0], (D, D), jnp.float32),
        "bq": 0.1 * jax.random.normal(ks[1], (1, D), jnp.float32),
        "wk": 0.1 * jax.random.normal(ks[2], (D, D), jnp.float32),
        "bk": 0.1 * jax.random.normal(ks[3], (1, D), jnp.float32),
        "wv": 0.1 * jax.random.normal(ks[4], (D, D), jnp.float32),
        "bv": 0.1 * jax.random.normal(ks[5], (1, D), jnp.float32),
        "wo": 0.1 * jax.random.normal(ks[6], (D, D), jnp.float32),
        "bo": 0.1 * jax.random.normal(ks[7], (1, D), jnp.float32),
        "g2": jnp.ones((1, D), jnp.float32),
        "be2": jnp.zeros((1, D), jnp.float32),
        "w1": 0.1 * jax.random.normal(ks[8], (D, Dff), jnp.float32),
        "b1": 0.1 * jax.random.normal(ks[9], (1, Dff), jnp.float32),
        "w2": 0.1 * jax.random.normal(ks[10], (Dff, D), jnp.float32),
        "b2": 0.1 * jax.random.normal(ks[11], (1, D), jnp.float32),
    }

    x = jax.random.normal(ks[12], (B, S, D), jnp.float32)
    # Key-padding mask (B, 1, S): 1 = attend, 0 = masked (pad last 3 keys of batch 1).
    mask = jnp.ones((B, 1, S), jnp.float32)
    mask = mask.at[1, :, -3:].set(0.0)

    ref = _reference(x, mask, params, n_heads=H)

    # Exact (f32) path, 2 q-tiles per sequence, K/V cached -- tight check.
    out = encoder_layer(x, mask, params, n_heads=H, q_tile=8,
                        matmul_dtype=jnp.float32, approx_softmax=False)
    out = jax.block_until_ready(out)
    np.testing.assert_allclose(np.asarray(out), np.asarray(ref), rtol=1e-5, atol=1e-5)

    # Exact path without the K/V cache (fully parallel q-tile axis) -- tight check.
    out_nc = encoder_layer(x, mask, params, n_heads=H, q_tile=8, cache_kv=False,
                           matmul_dtype=jnp.float32, approx_softmax=False)
    out_nc = jax.block_until_ready(out_nc)
    np.testing.assert_allclose(np.asarray(out_nc), np.asarray(ref), rtol=1e-5, atol=1e-5)

    # Default fast path: bf16 MXU inputs, f32 accumulation, approx reciprocal.
    out_lp = encoder_layer(x, mask, params, n_heads=H, q_tile=8)
    out_lp = jax.block_until_ready(out_lp)
    np.testing.assert_allclose(np.asarray(out_lp), np.asarray(ref), rtol=1e-1, atol=1e-1)

    print("KERNEL_OK")
</pallas_src>

<mosaic_0001>
module attributes {stable_mosaic.version = 11 : i64} {
  func.func @_encoder_layer_kernel(%arg0: i32, %arg1: i32, %arg2: i32, %arg3: memref<1x16x32xf32, #tpu.memory_space<vmem>>, %arg4: memref<1x8x32xf32, #tpu.memory_space<vmem>>, %arg5: memref<1x1x16xf32, #tpu.memory_space<vmem>>, %arg6: memref<4x32xf32, #tpu.memory_space<vmem>>, %arg7: memref<3x1x32x8xf32, #tpu.memory_space<vmem>>, %arg8: memref<3x1x1x8xf32, #tpu.memory_space<vmem>>, %arg9: memref<1x8x32xf32, #tpu.memory_space<vmem>>, %arg10: memref<1x32xf32, #tpu.memory_space<vmem>>, %arg11: memref<32x64xf32, #tpu.memory_space<vmem>>, %arg12: memref<1x64xf32, #tpu.memory_space<vmem>>, %arg13: memref<64x32xf32, #tpu.memory_space<vmem>>, %arg14: memref<1x32xf32, #tpu.memory_space<vmem>>, %arg15: memref<1x8x32xf32, #tpu.memory_space<vmem>>, %arg16: memref<4x16x8xf32, #tpu.memory_space<vmem>>, %arg17: memref<4x16x8xf32, #tpu.memory_space<vmem>>, %arg18: memref<8x32xf32, #tpu.memory_space<vmem>>) attributes {dimension_semantics = [#tpu.dimension_semantics<parallel>, #tpu.dimension_semantics<arbitrary>, #tpu.dimension_semantics<arbitrary>], iteration_bounds = array<i64: 2, 2, 4>, scalar_prefetch = 0 : i64, scratch_operands = 3 : i64, tpu.core_type = #tpu.core_type<tc>, window_params = [{transform_indices = @transform_0, window_bounds = array<i64: 1, 16, 32>}, {transform_indices = @transform_1, window_bounds = array<i64: 1, 8, 32>}, {transform_indices = @transform_2, window_bounds = array<i64: 1, 1, 16>}, {pipeline_mode = #tpu.pipeline_mode<synchronous>, transform_indices = @transform_3, window_bounds = array<i64: 4, 32>}, {transform_indices = @transform_4, window_bounds = array<i64: 3, 1, 32, 8>}, {transform_indices = @transform_5, window_bounds = array<i64: 3, 1, 1, 8>}, {transform_indices = @transform_6, window_bounds = array<i64: 1, 8, 32>}, {pipeline_mode = #tpu.pipeline_mode<synchronous>, transform_indices = @transform_7, window_bounds = array<i64: 1, 32>}, {pipeline_mode = #tpu.pipeline_mode<synchronous>, transform_indices = @transform_8, window_bounds = array<i64: 32, 64>}, {pipeline_mode = #tpu.pipeline_mode<synchronous>, transform_indices = @transform_9, window_bounds = array<i64: 1, 64>}, {pipeline_mode = #tpu.pipeline_mode<synchronous>, transform_indices = @transform_10, window_bounds = array<i64: 64, 32>}, {pipeline_mode = #tpu.pipeline_mode<synchronous>, transform_indices = @transform_11, window_bounds = array<i64: 1, 32>}, {transform_indices = @transform_12, window_bounds = array<i64: 1, 8, 32>}]} {
    %c0 = arith.constant 0 : index
    %c0_0 = arith.constant 0 : index
    %c0_1 = arith.constant 0 : index
    %0 = vector.load %arg4[%c0, %c0_0, %c0_1] : memref<1x8x32xf32, #tpu.memory_space<vmem>>, vector<1x8x32xf32>
    %1 = vector.shape_cast %0 : vector<1x8x32xf32> to vector<8x32xf32>
    %c0_2 = arith.constant 0 : index
    %c0_3 = arith.constant 0 : index
    %c0_4 = arith.constant 0 : index
    %2 = vector.load %arg5[%c0_2, %c0_3, %c0_4] : memref<1x1x16xf32, #tpu.memory_space<vmem>>, vector<1x1x16xf32>
    %3 = vector.shape_cast %2 : vector<1x1x16xf32> to vector<1x16xf32>
    %c0_5 = arith.constant 0 : index
    %c0_6 = arith.constant 0 : index
    %4 = vector.load %arg6[%c0_5, %c0_6] : memref<4x32xf32, #tpu.memory_space<vmem>>, vector<1x32xf32>
    %c1 = arith.constant 1 : index
    %c0_7 = arith.constant 0 : index
    %5 = vector.load %arg6[%c1, %c0_7] : memref<4x32xf32, #tpu.memory_space<vmem>>, vector<1x32xf32>
    %c2 = arith.constant 2 : index
    %c0_8 = arith.constant 0 : index
    %6 = vector.load %arg6[%c2, %c0_8] : memref<4x32xf32, #tpu.memory_space<vmem>>, vector<1x32xf32>
    %c3 = arith.constant 3 : index
    %c0_9 = arith.constant 0 : index
    %7 = vector.load %arg6[%c3, %c0_9] : memref<4x32xf32, #tpu.memory_space<vmem>>, vector<1x32xf32>
    %c0_10 = arith.constant 0 : index
    %c0_11 = arith.constant 0 : index
    %c0_12 = arith.constant 0 : index
    %c0_13 = arith.constant 0 : index
    %8 = vector.load %arg7[%c0_10, %c0_11, %c0_12, %c0_13] : memref<3x1x32x8xf32, #tpu.memory_space<vmem>>, vector<1x1x32x8xf32>
    %9 = vector.shape_cast %8 : vector<1x1x32x8xf32> to vector<32x8xf32>
    %c1_14 = arith.constant 1 : index
    %c0_15 = arith.constant 0 : index
    %c0_16 = arith.constant 0 : index
    %c0_17 = arith.constant 0 : index
    %10 = vector.load %arg7[%c1_14, %c0_15, %c0_16, %c0_17] : memref<3x1x32x8xf32, #tpu.memory_space<vmem>>, vector<1x1x32x8xf32>
    %11 = vector.shape_cast %10 : vector<1x1x32x8xf32> to vector<32x8xf32>
    %c2_18 = arith.constant 2 : index
    %c0_19 = arith.constant 0 : index
    %c0_20 = arith.constant 0 : index
    %c0_21 = arith.constant 0 : index
    %12 = vector.load %arg7[%c2_18, %c0_19, %c0_20, %c0_21] : memref<3x1x32x8xf32, #tpu.memory_space<vmem>>, vector<1x1x32x8xf32>
    %13 = vector.shape_cast %12 : vector<1x1x32x8xf32> to vector<32x8xf32>
    %c0_22 = arith.constant 0 : index
    %c0_23 = arith.constant 0 : index
    %c0_24 = arith.constant 0 : index
    %c0_25 = arith.constant 0 : index
    %14 = vector.load %arg8[%c0_22, %c0_23, %c0_24, %c0_25] : memref<3x1x1x8xf32, #tpu.memory_space<vmem>>, vector<1x1x1x8xf32>
    %15 = vector.shape_cast %14 : vector<1x1x1x8xf32> to vector<1x8xf32>
    %c1_26 = arith.constant 1 : index
    %c0_27 = arith.constant 0 : index
    %c0_28 = arith.constant 0 : index
    %c0_29 = arith.constant 0 : index
    %16 = vector.load %arg8[%c1_26, %c0_27, %c0_28, %c0_29] : memref<3x1x1x8xf32, #tpu.memory_space<vmem>>, vector<1x1x1x8xf32>
    %17 = vector.shape_cast %16 : vector<1x1x1x8xf32> to vector<1x8xf32>
    %c2_30 = arith.constant 2 : index
    %c0_31 = arith.constant 0 : index
    %c0_32 = arith.constant 0 : index
    %c0_33 = arith.constant 0 : index
    %18 = vector.load %arg8[%c2_30, %c0_31, %c0_32, %c0_33] : memref<3x1x1x8xf32, #tpu.memory_space<vmem>>, vector<1x1x1x8xf32>
    %19 = vector.shape_cast %18 : vector<1x1x1x8xf32> to vector<1x8xf32>
    %c0_i32 = arith.constant 0 : i32
    %20 = arith.cmpi eq, %arg2, %c0_i32 : i32
    %21 = arith.extui %20 : i1 to i32
    %c0_i32_34 = arith.constant 0 : i32
    %22 = arith.cmpi ne, %21, %c0_i32_34 : i32
    scf.if %22 {
      %cst_61 = arith.constant 0.000000e+00 : f32
      %83 = vector.broadcast %cst_61 : f32 to vector<8x32xf32>
      %c0_62 = arith.constant 0 : index
      %c0_63 = arith.constant 0 : index
      %84 = vector.load %arg18[%c0_62, %c0_63] : memref<8x32xf32, #tpu.memory_space<vmem>>, vector<8x32xf32>
      tpu.vector_store %arg18[%c0_62, %c0_63], %83 {strides = array<i32>} : memref<8x32xf32, #tpu.memory_space<vmem>>, vector<8x32xf32>,
    } else {
    }
    %c0_i32_35 = arith.constant 0 : i32
    %23 = arith.cmpi eq, %arg1, %c0_i32_35 : i32
    %24 = arith.extui %23 : i1 to i32
    %c0_i32_36 = arith.constant 0 : i32
    %25 = arith.cmpi ne, %24, %c0_i32_36 : i32
    scf.if %25 {
      %c0_61 = arith.constant 0 : index
      %c0_62 = arith.constant 0 : index
      %c0_63 = arith.constant 0 : index
      %83 = vector.load %arg3[%c0_61, %c0_62, %c0_63] : memref<1x16x32xf32, #tpu.memory_space<vmem>>, vector<1x16x32xf32>
      %84 = vector.shape_cast %83 : vector<1x16x32xf32> to vector<16x32xf32>
      %cst_64 = arith.constant dense<0.000000e+00> : vector<16xf32>
      %85 = vector.multi_reduction <add>, %84, %cst_64 [1] : vector<16x32xf32> to vector<16xf32>
      %86 = vector.shape_cast %85 : vector<16xf32> to vector<16x1xf32>
      %87 = arith.mulf %84, %84 : vector<16x32xf32>
      %cst_65 = arith.constant dense<0.000000e+00> : vector<16xf32>
      %88 = vector.multi_reduction <add>, %87, %cst_65 [1] : vector<16x32xf32> to vector<16xf32>
      %89 = vector.shape_cast %88 : vector<16xf32> to vector<16x1xf32>
      %cst_66 = arith.constant 3.125000e-02 : f32
      %90 = vector.broadcast %cst_66 : f32 to vector<16x1xf32>
      %91 = arith.mulf %86, %90 : vector<16x1xf32>
      %92 = arith.mulf %86, %91 : vector<16x1xf32>
      %93 = arith.subf %89, %92 : vector<16x1xf32>
      %cst_67 = arith.constant 0.0322580636 : f32
      %94 = vector.broadcast %cst_67 : f32 to vector<16x1xf32>
      %95 = arith.mulf %93, %94 : vector<16x1xf32>
      %cst_68 = arith.constant 0.000000e+00 : f32
      %96 = vector.broadcast %cst_68 : f32 to vector<16x1xf32>
      %97 = arith.maximumf %95, %96 : vector<16x1xf32>
      %98 = math.sqrt %97 : vector<16x1xf32>
      %cst_69 = arith.constant 9.99999997E-7 : f32
      %99 = vector.broadcast %cst_69 : f32 to vector<16x1xf32>
      %100 = arith.addf %98, %99 : vector<16x1xf32>
      %cst_70 = arith.constant 1.000000e+00 : f32
      %101 = vector.broadcast %cst_70 : f32 to vector<16x1xf32>
      %102 = arith.divf %101, %100 : vector<16x1xf32>
      %103 = vector.broadcast %91 : vector<16x1xf32> to vector<16x32xf32>
      %104 = arith.subf %84, %103 : vector<16x32xf32>
      %105 = vector.broadcast %102 : vector<16x1xf32> to vector<16x32xf32>
      %106 = arith.mulf %104, %105 : vector<16x32xf32>
      %107 = vector.broadcast %4 : vector<1x32xf32> to vector<16x32xf32>
      %108 = arith.mulf %107, %106 : vector<16x32xf32>
      %109 = vector.broadcast %5 : vector<1x32xf32> to vector<16x32xf32>
      %110 = arith.addf %108, %109 : vector<16x32xf32>
      %cst_71 = arith.constant dense<0.000000e+00> : vector<16x8xf32>
      %111 = tpu.matmul %110, %11, %cst_71 {dimension_numbers = #tpu.dot_dimension_numbers<[1], [0], [0], [1], [0, 0, 1, 1], [], []>} : vector<16x32xf32>, vector<32x8xf32>, vector<16x8xf32> -> vector<16x8xf32>
      %112 = vector.broadcast %17 : vector<1x8xf32> to vector<16x8xf32>
      %113 = arith.addf %111, %112 : vector<16x8xf32>
      %114 = arith.index_cast %arg2 : i32 to index
      %c0_72 = arith.constant 0 : index
      %c0_73 = arith.constant 0 : index
      %115 = vector.load %arg16[%114, %c0_72, %c0_73] : memref<4x16x8xf32, #tpu.memory_space<vmem>>, vector<1x16x8xf32>
      %116 = vector.shape_cast %115 : vector<1x16x8xf32> to vector<16x8xf32>
      %117 = vector.shape_cast %113 : vector<16x8xf32> to vector<1x16x8xf32>
      tpu.vector_store %arg16[%114, %c0_72, %c0_73], %117 {strides = array<i32>} : memref<4x16x8xf32, #tpu.memory_space<vmem>>, vector<1x16x8xf32>,
      %cst_74 = arith.constant dense<0.000000e+00> : vector<16x8xf32>
      %118 = tpu.matmul %110, %13, %cst_74 {dimension_numbers = #tpu.dot_dimension_numbers<[1], [0], [0], [1], [0, 0, 1, 1], [], []>} : vector<16x32xf32>, vector<32x8xf32>, vector<16x8xf32> -> vector<16x8xf32>
      %119 = vector.broadcast %19 : vector<1x8xf32> to vector<16x8xf32>
      %120 = arith.addf %118, %119 : vector<16x8xf32>
      %121 = arith.index_cast %arg2 : i32 to index
      %c0_75 = arith.constant 0 : index
      %c0_76 = arith.constant 0 : index
      %122 = vector.load %arg17[%121, %c0_75, %c0_76] : memref<4x16x8xf32, #tpu.memory_space<vmem>>, vector<1x16x8xf32>
      %123 = vector.shape_cast %122 : vector<1x16x8xf32> to vector<16x8xf32>
      %124 = vector.shape_cast %120 : vector<16x8xf32> to vector<1x16x8xf32>
      tpu.vector_store %arg17[%121, %c0_75, %c0_76], %124 {strides = array<i32>} : memref<4x16x8xf32, #tpu.memory_space<vmem>>, vector<1x16x8xf32>,
    } else {
    }
    %26 = arith.index_cast %arg2 : i32 to index
    %c0_37 = arith.constant 0 : index
    %c0_38 = arith.constant 0 : index
    %27 = vector.load %arg16[%26, %c0_37, %c0_38] : memref<4x16x8xf32, #tpu.memory_space<vmem>>, vector<1x16x8xf32>
    %28 = vector.shape_cast %27 : vector<1x16x8xf32> to vector<16x8xf32>
    %29 = arith.index_cast %arg2 : i32 to index
    %c0_39 = arith.constant 0 : index
    %c0_40 = arith.constant 0 : index
    %30 = vector.load %arg17[%29, %c0_39, %c0_40] : memref<4x16x8xf32, #tpu.memory_space<vmem>>, vector<1x16x8xf32>
    %31 = vector.shape_cast %30 : vector<1x16x8xf32> to vector<16x8xf32>
    %cst = arith.constant dense<0.000000e+00> : vector<8xf32>
    %32 = vector.multi_reduction <add>, %1, %cst [1] : vector<8x32xf32> to vector<8xf32>
    %33 = vector.shape_cast %32 : vector<8xf32> to vector<8x1xf32>
    %34 = arith.mulf %1, %1 : vector<8x32xf32>
    %cst_41 = arith.constant dense<0.000000e+00> : vector<8xf32>
    %35 = vector.multi_reduction <add>, %34, %cst_41 [1] : vector<8x32xf32> to vector<8xf32>
    %36 = vector.shape_cast %35 : vector<8xf32> to vector<8x1xf32>
    %cst_42 = arith.constant 3.125000e-02 : f32
    %37 = vector.broadcast %cst_42 : f32 to vector<8x1xf32>
    %38 = arith.mulf %33, %37 : vector<8x1xf32>
    %39 = arith.mulf %33, %38 : vector<8x1xf32>
    %40 = arith.subf %36, %39 : vector<8x1xf32>
    %cst_43 = arith.constant 0.0322580636 : f32
    %41 = vector.broadcast %cst_43 : f32 to vector<8x1xf32>
    %42 = arith.mulf %40, %41 : vector<8x1xf32>
    %cst_44 = arith.constant 0.000000e+00 : f32
    %43 = vector.broadcast %cst_44 : f32 to vector<8x1xf32>
    %44 = arith.maximumf %42, %43 : vector<8x1xf32>
    %45 = math.sqrt %44 : vector<8x1xf32>
    %cst_45 = arith.constant 9.99999997E-7 : f32
    %46 = vector.broadcast %cst_45 : f32 to vector<8x1xf32>
    %47 = arith.addf %45, %46 : vector<8x1xf32>
    %cst_46 = arith.constant 1.000000e+00 : f32
    %48 = vector.broadcast %cst_46 : f32 to vector<8x1xf32>
    %49 = arith.divf %48, %47 : vector<8x1xf32>
    %50 = vector.broadcast %38 : vector<8x1xf32> to vector<8x32xf32>
    %51 = arith.subf %1, %50 : vector<8x32xf32>
    %52 = vector.broadcast %49 : vector<8x1xf32> to vector<8x32xf32>
    %53 = arith.mulf %51, %52 : vector<8x32xf32>
    %54 = vector.broadcast %4 : vector<1x32xf32> to vector<8x32xf32>
    %55 = arith.mulf %54, %53 : vector<8x32xf32>
    %56 = vector.broadcast %5 : vector<1x32xf32> to vector<8x32xf32>
    %57 = arith.addf %55, %56 : vector<8x32xf32>
    %cst_47 = arith.constant dense<0.000000e+00> : vector<8x8xf32>
    %58 = tpu.matmul %57, %9, %cst_47 {dimension_numbers = #tpu.dot_dimension_numbers<[1], [0], [0], [1], [0, 0, 1, 1], [], []>} : vector<8x32xf32>, vector<32x8xf32>, vector<8x8xf32> -> vector<8x8xf32>
    %59 = vector.broadcast %15 : vector<1x8xf32> to vector<8x8xf32>
    %60 = arith.addf %58, %59 : vector<8x8xf32>
    %cst_48 = arith.constant dense<0.000000e+00> : vector<8x16xf32>
    %61 = tpu.matmul %60, %28, %cst_48 {dimension_numbers = #tpu.dot_dimension_numbers<[1], [1], [0], [0], [0, 0, 1, 0], [], []>} : vector<8x8xf32>, vector<16x8xf32>, vector<8x16xf32> -> vector<8x16xf32>
    %62 = vector.broadcast %3 : vector<1x16xf32> to vector<8x16xf32>
    %63 = arith.addf %61, %62 : vector<8x16xf32>
    %cst_49 = arith.constant dense<0xFF800000> : vector<8xf32>
    %64 = vector.multi_reduction <maximumf>, %63, %cst_49 [1] : vector<8x16xf32> to vector<8xf32>
    %65 = vector.shape_cast %64 : vector<8xf32> to vector<8x1xf32>
    %66 = vector.broadcast %65 : vector<8x1xf32> to vector<8x16xf32>
    %67 = arith.subf %63, %66 : vector<8x16xf32>
    %68 = math.exp %67 : vector<8x16xf32>
    %cst_50 = arith.constant dense<0.000000e+00> : vector<8xf32>
    %69 = vector.multi_reduction <add>, %68, %cst_50 [1] : vector<8x16xf32> to vector<8xf32>
    %70 = vector.shape_cast %69 : vector<8xf32> to vector<8x1xf32>
    %71 = vector.broadcast %70 : vector<8x1xf32> to vector<8x16xf32>
    %72 = arith.divf %68, %71 : vector<8x16xf32>
    %cst_51 = arith.constant dense<0.000000e+00> : vector<8x8xf32>
    %73 = tpu.matmul %72, %31, %cst_51 {dimension_numbers = #tpu.dot_dimension_numbers<[1], [0], [0], [1], [0, 0, 1, 1], [], []>} : vector<8x16xf32>, vector<16x8xf32>, vector<8x8xf32> -> vector<8x8xf32>
    %c0_52 = arith.constant 0 : index
    %c0_53 = arith.constant 0 : index
    %74 = vector.load %arg18[%c0_52, %c0_53] : memref<8x32xf32, #tpu.memory_space<vmem>>, vector<8x32xf32>
    %c0_54 = arith.constant 0 : index
    %c0_55 = arith.constant 0 : index
    %c0_56 = arith.constant 0 : index
    %75 = vector.load %arg9[%c0_54, %c0_55, %c0_56] : memref<1x8x32xf32, #tpu.memory_space<vmem>>, vector<1x8x32xf32>
    %76 = vector.shape_cast %75 : vector<1x8x32xf32> to vector<8x32xf32>
    %cst_57 = arith.constant dense<0.000000e+00> : vector<8x32xf32>
    %77 = tpu.matmul %73, %76, %cst_57 {dimension_numbers = #tpu.dot_dimension_numbers<[1], [0], [0], [1], [0, 0, 1, 1], [], []>} : vector<8x8xf32>, vector<8x32xf32>, vector<8x32xf32> -> vector<8x32xf32>
    %78 = arith.addf %74, %77 : vector<8x32xf32>
    %c0_58 = arith.constant 0 : index
    %c0_59 = arith.constant 0 : index
    %79 = vector.load %arg18[%c0_58, %c0_59] : memref<8x32xf32, #tpu.memory_space<vmem>>, vector<8x32xf32>
    tpu.vector_store %arg18[%c0_58, %c0_59], %78 {strides = array<i32>} : memref<8x32xf32, #tpu.memory_space<vmem>>, vector<8x32xf32>,
    %c3_i32 = arith.constant 3 : i32
    %80 = arith.cmpi eq, %arg2, %c3_i32 : i32
    %81 = arith.extui %80 : i1 to i32
    %c0_i32_60 = arith.constant 0 : i32
    %82 = arith.cmpi ne, %81, %c0_i32_60 : i32
    scf.if %82 {
      %c0_61 = arith.constant 0 : index
      %c0_62 = arith.constant 0 : index
      %83 = vector.load %arg18[%c0_61, %c0_62] : memref<8x32xf32, #tpu.memory_space<vmem>>, vector<8x32xf32>
      %84 = arith.addf %1, %83 : vector<8x32xf32>
      %c0_63 = arith.constant 0 : index
      %c0_64 = arith.constant 0 : index
      %85 = vector.load %arg10[%c0_63, %c0_64] : memref<1x32xf32, #tpu.memory_space<vmem>>, vector<1x32xf32>
      %86 = vector.broadcast %85 : vector<1x32xf32> to vector<8x32xf32>
      %87 = arith.addf %84, %86 : vector<8x32xf32>
      %cst_65 = arith.constant dense<0.000000e+00> : vector<8xf32>
      %88 = vector.multi_reduction <add>, %87, %cst_65 [1] : vector<8x32xf32> to vector<8xf32>
      %89 = vector.shape_cast %88 : vector<8xf32> to vector<8x1xf32>
      %90 = arith.mulf %87, %87 : vector<8x32xf32>
      %cst_66 = arith.constant dense<0.000000e+00> : vector<8xf32>
      %91 = vector.multi_reduction <add>, %90, %cst_66 [1] : vector<8x32xf32> to vector<8xf32>
      %92 = vector.shape_cast %91 : vector<8xf32> to vector<8x1xf32>
      %cst_67 = arith.constant 3.125000e-02 : f32
      %93 = vector.broadcast %cst_67 : f32 to vector<8x1xf32>
      %94 = arith.mulf %89, %93 : vector<8x1xf32>
      %95 = arith.mulf %89, %94 : vector<8x1xf32>
      %96 = arith.subf %92, %95 : vector<8x1xf32>
      %cst_68 = arith.constant 0.0322580636 : f32
      %97 = vector.broadcast %cst_68 : f32 to vector<8x1xf32>
      %98 = arith.mulf %96, %97 : vector<8x1xf32>
      %cst_69 = arith.constant 0.000000e+00 : f32
      %99 = vector.broadcast %cst_69 : f32 to vector<8x1xf32>
      %100 = arith.maximumf %98, %99 : vector<8x1xf32>
      %101 = math.sqrt %100 : vector<8x1xf32>
      %cst_70 = arith.constant 9.99999997E-7 : f32
      %102 = vector.broadcast %cst_70 : f32 to vector<8x1xf32>
      %103 = arith.addf %101, %102 : vector<8x1xf32>
      %cst_71 = arith.constant 1.000000e+00 : f32
      %104 = vector.broadcast %cst_71 : f32 to vector<8x1xf32>
      %105 = arith.divf %104, %103 : vector<8x1xf32>
      %106 = vector.broadcast %94 : vector<8x1xf32> to vector<8x32xf32>
      %107 = arith.subf %87, %106 : vector<8x32xf32>
      %108 = vector.broadcast %105 : vector<8x1xf32> to vector<8x32xf32>
      %109 = arith.mulf %107, %108 : vector<8x32xf32>
      %110 = vector.broadcast %6 : vector<1x32xf32> to vector<8x32xf32>
      %111 = arith.mulf %110, %109 : vector<8x32xf32>
      %112 = vector.broadcast %7 : vector<1x32xf32> to vector<8x32xf32>
      %113 = arith.addf %111, %112 : vector<8x32xf32>
      %c0_72 = arith.constant 0 : index
      %c0_73 = arith.constant 0 : index
      %114 = vector.load %arg11[%c0_72, %c0_73] : memref<32x64xf32, #tpu.memory_space<vmem>>, vector<32x64xf32>
      %cst_74 = arith.constant dense<0.000000e+00> : vector<8x64xf32>
      %115 = tpu.matmul %113, %114, %cst_74 {dimension_numbers = #tpu.dot_dimension_numbers<[1], [0], [0], [1], [0, 0, 1, 1], [], []>} : vector<8x32xf32>, vector<32x64xf32>, vector<8x64xf32> -> vector<8x64xf32>
      %c0_75 = arith.constant 0 : index
      %c0_76 = arith.constant 0 : index
      %116 = vector.load %arg12[%c0_75, %c0_76] : memref<1x64xf32, #tpu.memory_space<vmem>>, vector<1x64xf32>
      %117 = vector.broadcast %116 : vector<1x64xf32> to vector<8x64xf32>
      %118 = arith.addf %115, %117 : vector<8x64xf32>
      %cst_77 = arith.constant 0.000000e+00 : f32
      %119 = vector.broadcast %cst_77 : f32 to vector<8x64xf32>
      %120 = arith.maximumf %118, %119 : vector<8x64xf32>
      %c0_78 = arith.constant 0 : index
      %c0_79 = arith.constant 0 : index
      %121 = vector.load %arg13[%c0_78, %c0_79] : memref<64x32xf32, #tpu.memory_space<vmem>>, vector<64x32xf32>
      %cst_80 = arith.constant dense<0.000000e+00> : vector<8x32xf32>
      %122 = tpu.matmul %120, %121, %cst_80 {dimension_numbers = #tpu.dot_dimension_numbers<[1], [0], [0], [1], [0, 0, 1, 1], [], []>} : vector<8x64xf32>, vector<64x32xf32>, vector<8x32xf32> -> vector<8x32xf32>
      %c0_81 = arith.constant 0 : index
      %c0_82 = arith.constant 0 : index
      %123 = vector.load %arg14[%c0_81, %c0_82] : memref<1x32xf32, #tpu.memory_space<vmem>>, vector<1x32xf32>
      %124 = vector.broadcast %123 : vector<1x32xf32> to vector<8x32xf32>
      %125 = arith.addf %122, %124 : vector<8x32xf32>
      %126 = arith.addf %87, %125 : vector<8x32xf32>
      %c0_83 = arith.constant 0 : index
      %c0_84 = arith.constant 0 : index
      %c0_85 = arith.constant 0 : index
      %127 = vector.load %arg15[%c0_83, %c0_84, %c0_85] : memref<1x8x32xf32, #tpu.memory_space<vmem>>, vector<1x8x32xf32>
      %128 = vector.shape_cast %127 : vector<1x8x32xf32> to vector<8x32xf32>
      %129 = vector.shape_cast %126 : vector<8x32xf32> to vector<1x8x32xf32>
      tpu.vector_store %arg15[%c0_83, %c0_84, %c0_85], %129 {strides = array<i32>} : memref<1x8x32xf32, #tpu.memory_space<vmem>>, vector<1x8x32xf32>,
    } else {
    }
    return
  }
  func.func @transform_0(%arg0: i32, %arg1: i32, %arg2: i32) -> (i32, i32, i32) {
    %c0_i32 = arith.constant 0 : i32
    %c0_i32_0 = arith.constant 0 : i32
    %c0_i32_1 = arith.constant 0 : i32
    return %arg0, %c0_i32, %c0_i32_0 : i32, i32, i32
  }
  func.func @transform_1(%arg0: i32, %arg1: i32, %arg2: i32) -> (i32, i32, i32) {
    %c0_i32 = arith.constant 0 : i32
    %c0_i32_0 = arith.constant 0 : i32
    return %arg0, %arg1, %c0_i32 : i32, i32, i32
  }
  func.func @transform_2(%arg0: i32, %arg1: i32, %arg2: i32) -> (i32, i32, i32) {
    %c0_i32 = arith.constant 0 : i32
    %c0_i32_0 = arith.constant 0 : i32
    %c0_i32_1 = arith.constant 0 : i32
    return %arg0, %c0_i32, %c0_i32_0 : i32, i32, i32
  }
  func.func @transform_3(%arg0: i32, %arg1: i32, %arg2: i32) -> (i32, i32) {
    %c0_i32 = arith.constant 0 : i32
    %c0_i32_0 = arith.constant 0 : i32
    %c0_i32_1 = arith.constant 0 : i32
    return %c0_i32, %c0_i32_0 : i32, i32
  }
  func.func @transform_4(%arg0: i32, %arg1: i32, %arg2: i32) -> (i32, i32, i32, i32) {
    %c0_i32 = arith.constant 0 : i32
    %c0_i32_0 = arith.constant 0 : i32
    %c0_i32_1 = arith.constant 0 : i32
    %c0_i32_2 = arith.constant 0 : i32
    return %c0_i32, %arg2, %c0_i32_0, %c0_i32_1 : i32, i32, i32, i32
  }
  func.func @transform_5(%arg0: i32, %arg1: i32, %arg2: i32) -> (i32, i32, i32, i32) {
    %c0_i32 = arith.constant 0 : i32
    %c0_i32_0 = arith.constant 0 : i32
    %c0_i32_1 = arith.constant 0 : i32
    %c0_i32_2 = arith.constant 0 : i32
    return %c0_i32, %arg2, %c0_i32_0, %c0_i32_1 : i32, i32, i32, i32
  }
  func.func @transform_6(%arg0: i32, %arg1: i32, %arg2: i32) -> (i32, i32, i32) {
    %c0_i32 = arith.constant 0 : i32
    %c0_i32_0 = arith.constant 0 : i32
    %c0_i32_1 = arith.constant 0 : i32
    return %arg2, %c0_i32, %c0_i32_0 : i32, i32, i32
  }
  func.func @transform_7(%arg0: i32, %arg1: i32, %arg2: i32) -> (i32, i32) {
    %c0_i32 = arith.constant 0 : i32
    %c0_i32_0 = arith.constant 0 : i32
    %c0_i32_1 = arith.constant 0 : i32
    return %c0_i32, %c0_i32_0 : i32, i32
  }
  func.func @transform_8(%arg0: i32, %arg1: i32, %arg2: i32) -> (i32, i32) {
    %c0_i32 = arith.constant 0 : i32
    %c0_i32_0 = arith.constant 0 : i32
    %c0_i32_1 = arith.constant 0 : i32
    return %c0_i32, %c0_i32_0 : i32, i32
  }
  func.func @transform_9(%arg0: i32, %arg1: i32, %arg2: i32) -> (i32, i32) {
    %c0_i32 = arith.constant 0 : i32
    %c0_i32_0 = arith.constant 0 : i32
    %c0_i32_1 = arith.constant 0 : i32
    return %c0_i32, %c0_i32_0 : i32, i32
  }
  func.func @transform_10(%arg0: i32, %arg1: i32, %arg2: i32) -> (i32, i32) {
    %c0_i32 = arith.constant 0 : i32
    %c0_i32_0 = arith.constant 0 : i32
    %c0_i32_1 = arith.constant 0 : i32
    return %c0_i32, %c0_i32_0 : i32, i32
  }
  func.func @transform_11(%arg0: i32, %arg1: i32, %arg2: i32) -> (i32, i32) {
    %c0_i32 = arith.constant 0 : i32
    %c0_i32_0 = arith.constant 0 : i32
    %c0_i32_1 = arith.constant 0 : i32
    return %c0_i32, %c0_i32_0 : i32, i32
  }
  func.func @transform_12(%arg0: i32, %arg1: i32, %arg2: i32) -> (i32, i32, i32) {
    %c0_i32 = arith.constant 0 : i32
    %c0_i32_0 = arith.constant 0 : i32
    return %arg0, %arg1, %c0_i32 : i32, i32, i32
  }
}

</mosaic_0001>

<llo_original>
// kernel: tpu_custom_call.1
$region0: #{tpu_custom_call.1}
  #allocation0 [shape = 'u32[]', space=smem, size = 0x4, offset = 0x4, fixed_abs, tag = 'smem constant byte address 0x4 - core index']
  #allocation1 [shape = 'u32[144,128]{1,0:T(1,128)}', space=vmem, size = 0x12000, scoped, tag = 'internal scratch']
  #allocation2 [shape = 'f32[4,16,8]{2,1,0:T(8,128)}', space=vmem, size = 0x8000, scoped, tag = 'scratch operand']
  #allocation3 [shape = 'f32[4,16,8]{2,1,0:T(8,128)}', space=vmem, size = 0x8000, scoped, tag = 'scratch operand']
  #allocation4 [shape = 'f32[8,32]{1,0:T(8,128)}', space=vmem, size = 0x1000, scoped, tag = 'scratch operand']
  %s0 = inlined_call_operand.vmem [shape: f32[2,16,32], index: 0, kind: input, shape index: {}]
  %s1 = inlined_call_operand.vmem [shape: f32[2,16,32], index: 1, kind: input, shape index: {}]
  %s2 = inlined_call_operand.vmem [shape: f32[2,1,16], index: 2, kind: input, shape index: {}]
  %s3 = inlined_call_operand.vmem [shape: f32[4,32], index: 3, kind: input, shape index: {}]
  %s4 = inlined_call_operand.vmem [shape: f32[3,4,32,8], index: 4, kind: input, shape index: {}]
  %s5 = inlined_call_operand.vmem [shape: f32[3,4,1,8], index: 5, kind: input, shape index: {}]
  %s6 = inlined_call_operand.vmem [shape: f32[4,8,32], index: 6, kind: input, shape index: {}]
  %s7 = inlined_call_operand.vmem [shape: f32[1,32], index: 7, kind: input, shape index: {}]
  %s8 = inlined_call_operand.vmem [shape: f32[32,64], index: 8, kind: input, shape index: {}]
  %s9 = inlined_call_operand.vmem [shape: f32[1,64], index: 9, kind: input, shape index: {}]
  %s10 = inlined_call_operand.vmem [shape: f32[64,32], index: 10, kind: input, shape index: {}]
  %s11 = inlined_call_operand.vmem [shape: f32[1,32], index: 11, kind: input, shape index: {}]
  %s12 = inlined_call_operand.hbm [shape: f32[2,16,32], index: 12, kind: output, shape index: {}]
  %s13 = sld [smem:[#allocation0]]
  $region165: #{tpu_custom_call.1} parent=0
    _
  %s15 = ssub.s32 1, %s13
  %s16 = scalar_select 0, %s15, %s13
  $region1: #{tpu_custom_call.1} parent=0
    #allocation5 [shape = 'u8[98304]{0}', space=vmem, size = 0x18000, scoped, tag = 'input window, operand 4']
    #allocation6 [shape = 'u8[3072]{0}', space=vmem, size = 0xc00, scoped, tag = 'input window, operand 5']
    #allocation7 [shape = 'u8[8192]{0}', space=vmem, size = 0x2000, scoped, tag = 'output window, operand 0']
    #allocation8 [shape = 's32[2]{0}', space=sflag, size = 0x8, scoped, tag = 'scoped memory for tpu_custom_call.1']
    %17 = vsyncpa [#allocation8], 0
    %s18 = scalar_lea.sflag [#allocation8], 1
    %19 = vsyncpa %s18, 0
    loop: start=0, step=1, limit=18
    $region2: #{tpu_custom_call.1} parent=1 // loop_pre_header
      _
    $region3: #{tpu_custom_call.1} parent=1 // loop_header
      %s21 = sphi 0, %s25
      %p22 = scmp.ge.s32.totalorder %s21, 18
      %s28 = sphi 0, %s47
      %s29 = sphi 0, %s43
      %s30 = sphi 0, %s39
      %s31 = sphi 0, %s28
      %s32 = sphi 0, %s29
      %s33 = sphi 0, %s30
      %s34 = sphi 0, %s31
      %s35 = sphi 0, %s32
      %s36 = sphi 0, %s33
      %s50 = sphi 0, %s52
      %s53 = sphi 0, %s50
      %s54 = sphi 0, %s53
      %s70 = sphi 0, %s54
      %s78 = sphi 0, %s80
      %s81 = sphi 0, %s78
      %s82 = sphi 0, %s81
      %s98 = sphi 0, %s82
      %s104 = sphi 0, %s106
      %s107 = sphi 0, %s104
      %s108 = sphi 0, %s107
      %s124 = sphi 0, %s108
      %s128 = sphi 0, %s128
      %s130 = sphi 0, %s128
      %s131 = sphi 0, %s130
      %s145 = sphi 0, %s131
      %s151 = sphi 0, %s153
      %s154 = sphi 0, %s151
      %s155 = sphi 0, %s154
      %s171 = sphi 0, %s155
      %s177 = sphi 0, %s179
      %s180 = sphi 0, %s177
      %s181 = sphi 0, %s180
      %s197 = sphi 0, %s181
      %s203 = sphi 0, %s205
      %s206 = sphi 0, %s203
      %s207 = sphi 0, %s206
      %s223 = sphi 0, %s207
      %s227 = sphi 0, %s227
      %s229 = sphi 0, %s227
      %s230 = sphi 0, %s229
      %s244 = sphi 0, %s230
      %s248 = sphi 0, %s248
      %s250 = sphi 0, %s248
      %s251 = sphi 0, %s250
      %s265 = sphi 0, %s251
      %s269 = sphi 0, %s269
      %s271 = sphi 0, %s269
      %s272 = sphi 0, %s271
      %s286 = sphi 0, %s272
      %s290 = sphi 0, %s290
      %s292 = sphi 0, %s290
      %s293 = sphi 0, %s292
      %s307 = sphi 0, %s293
      %s311 = sphi 0, %s311
      %s313 = sphi 0, %s311
      %s314 = sphi 0, %s313
      %s328 = sphi 0, %s314
      %s336 = sphi 0, %s338
      %s339 = sphi 0, %s336
      %s340 = sphi 0, %s339
      %s356 = sphi 0, %s340
    $region4: #{tpu_custom_call.1} parent=1 // loop_header_branch
      %24 = sbr.rel (%p22) target = $region8
    $region5: #{tpu_custom_call.1} parent=1 // loop_body
      %s26 = ssub.s32 %s21, 1
      %s27 = ssub.s32 %s21, 2
      %s37 = sadd.s32 1, %s30
      %p38 = scmp.ge.s32.totalorder %s37, 4
      %s39 = scalar_select %p38, 0, %s37
      %s40 = sadd.s32 1, %s29
      %s41 = scalar_select %p38, %s40, %s29
      %p42 = scmp.ge.s32.totalorder %s41, 2
      %s43 = scalar_select %p42, 0, %s41
      %s44 = sadd.s32 1, %s28
      %s45 = scalar_select %p42, %s44, %s28
      %p46 = scmp.ge.s32.totalorder %s45, 2
      %s47 = scalar_select %p46, 0, %s45
      %s48 = ssub.s32 %s28, %s47
      %p49 = scmp.eq.s32.totalorder %s48, 0
      %s51 = sadd.s32 %s50, 1
      %s52 = scalar_select %p49, %s50, %s51
      %p55 = pneg %p49
      %p56 = scmp.eq.s32.totalorder %s21, 15
      %p57 = por %p55, %p56
      %p58 = scmp.ne.s32.totalorder %s50, %s53
      %p59 = scmp.eq.s32.totalorder %s21, 0
      %p60 = por %p58, %p59
      %p61 = scmp.ne.s32.totalorder %s50, %s53
      %p62 = scmp.eq.s32.totalorder %s26, 15
      %p63 = por %p61, %p62
      %p64 = scmp.ne.s32.totalorder %s53, %s54
      %p65 = scmp.eq.s32.totalorder %s26, 0
      %p66 = por %p64, %p65
      %p67 = scmp.ne.s32.totalorder %s53, %s54
      %p68 = scmp.eq.s32.totalorder %s27, 15
      %p69 = por %p67, %p68
      %p71 = scmp.ne.s32.totalorder %s54, %s70
      %p72 = scmp.eq.s32.totalorder %s27, 0
      %p73 = por %p71, %p72
      %s74 = ssub.s32 %s28, %s47
      %s75 = ssub.s32 %s29, %s43
      %s76 = sor.u32 %s74, %s75
      %p77 = scmp.eq.s32.totalorder %s76, 0
      %s79 = sadd.s32 %s78, 1
      %s80 = scalar_select %p77, %s78, %s79
      %p83 = pneg %p77
      %p84 = scmp.eq.s32.totalorder %s21, 15
      %p85 = por %p83, %p84
      %p86 = scmp.ne.s32.totalorder %s78, %s81
      %p87 = scmp.eq.s32.totalorder %s21, 0
      %p88 = por %p86, %p87
      %p89 = scmp.ne.s32.totalorder %s78, %s81
      %p90 = scmp.eq.s32.totalorder %s26, 15
      %p91 = por %p89, %p90
      %p92 = scmp.ne.s32.totalorder %s81, %s82
      %p93 = scmp.eq.s32.totalorder %s26, 0
      %p94 = por %p92, %p93
      %p95 = scmp.ne.s32.totalorder %s81, %s82
      %p96 = scmp.eq.s32.totalorder %s27, 15
      %p97 = por %p95, %p96
      %p99 = scmp.ne.s32.totalorder %s82, %s98
      %p100 = scmp.eq.s32.totalorder %s27, 0
      %p101 = por %p99, %p100
      %s102 = ssub.s32 %s28, %s47
      %p103 = scmp.eq.s32.totalorder %s102, 0
      %s105 = sadd.s32 %s104, 1
      %s106 = scalar_select %p103, %s104, %s105
      %p109 = pneg %p103
      %p110 = scmp.eq.s32.totalorder %s21, 15
      %p111 = por %p109, %p110
      %p112 = scmp.ne.s32.totalorder %s104, %s107
      %p113 = scmp.eq.s32.totalorder %s21, 0
      %p114 = por %p112, %p113
      %p115 = scmp.ne.s32.totalorder %s104, %s107
      %p116 = scmp.eq.s32.totalorder %s26, 15
      %p117 = por %p115, %p116
      %p118 = scmp.ne.s32.totalorder %s107, %s108
      %p119 = scmp.eq.s32.totalorder %s26, 0
      %p120 = por %p118, %p119
      %p121 = scmp.ne.s32.totalorder %s107, %s108
      %p122 = scmp.eq.s32.totalorder %s27, 15
      %p123 = por %p121, %p122
      %p125 = scmp.ne.s32.totalorder %s108, %s124
      %p126 = scmp.eq.s32.totalorder %s27, 0
      %p127 = por %p125, %p126
      %s129 = sadd.s32 %s128, 1
      %p132 = scmp.eq.s32.totalorder %s21, 15
      %p133 = scmp.ne.s32.totalorder %s128, %s130
      %p134 = scmp.eq.s32.totalorder %s21, 0
      %p135 = por %p133, %p134
      %p136 = scmp.ne.s32.totalorder %s128, %s130
      %p137 = scmp.eq.s32.totalorder %s26, 15
      %p138 = por %p136, %p137
      %p139 = scmp.ne.s32.totalorder %s130, %s131
      %p140 = scmp.eq.s32.totalorder %s26, 0
      %p141 = por %p139, %p140
      %p142 = scmp.ne.s32.totalorder %s130, %s131
      %p143 = scmp.eq.s32.totalorder %s27, 15
      %p144 = por %p142, %p143
      %p146 = scmp.ne.s32.totalorder %s131, %s145
      %p147 = scmp.eq.s32.totalorder %s27, 0
      %p148 = por %p146, %p147
      %s149 = ssub.s32 %s30, %s39
      %p150 = scmp.eq.s32.totalorder %s149, 0
      %s152 = sadd.s32 %s151, 1
      %s153 = scalar_select %p150, %s151, %s152
      %p156 = pneg %p150
      %p157 = scmp.eq.s32.totalorder %s21, 15
      %p158 = por %p156, %p157
      %p159 = scmp.ne.s32.totalorder %s151, %s154
      %p160 = scmp.eq.s32.totalorder %s21, 0
      %p161 = por %p159, %p160
      %p162 = scmp.ne.s32.totalorder %s151, %s154
      %p163 = scmp.eq.s32.totalorder %s26, 15
      %p164 = por %p162, %p163
      %p165 = scmp.ne.s32.totalorder %s154, %s155
      %p166 = scmp.eq.s32.totalorder %s26, 0
      %p167 = por %p165, %p166
      %p168 = scmp.ne.s32.totalorder %s154, %s155
      %p169 = scmp.eq.s32.totalorder %s27, 15
      %p170 = por %p168, %p169
      %p172 = scmp.ne.s32.totalorder %s155, %s171
      %p173 = scmp.eq.s32.totalorder %s27, 0
      %p174 = por %p172, %p173
      %s175 = ssub.s32 %s30, %s39
      %p176 = scmp.eq.s32.totalorder %s175, 0
      %s178 = sadd.s32 %s177, 1
      %s179 = scalar_select %p176, %s177, %s178
      %p182 = pneg %p176
      %p183 = scmp.eq.s32.totalorder %s21, 15
      %p184 = por %p182, %p183
      %p185 = scmp.ne.s32.totalorder %s177, %s180
      %p186 = scmp.eq.s32.totalorder %s21, 0
      %p187 = por %p185, %p186
      %p188 = scmp.ne.s32.totalorder %s177, %s180
      %p189 = scmp.eq.s32.totalorder %s26, 15
      %p190 = por %p188, %p189
      %p191 = scmp.ne.s32.totalorder %s180, %s181
      %p192 = scmp.eq.s32.totalorder %s26, 0
      %p193 = por %p191, %p192
      %p194 = scmp.ne.s32.totalorder %s180, %s181
      %p195 = scmp.eq.s32.totalorder %s27, 15
      %p196 = por %p194, %p195
      %p198 = scmp.ne.s32.totalorder %s181, %s197
      %p199 = scmp.eq.s32.totalorder %s27, 0
      %p200 = por %p198, %p199
      %s201 = ssub.s32 %s30, %s39
      %p202 = scmp.eq.s32.totalorder %s201, 0
      %s204 = sadd.s32 %s203, 1
      %s205 = scalar_select %p202, %s203, %s204
      %p208 = pneg %p202
      %p209 = scmp.eq.s32.totalorder %s21, 15
      %p210 = por %p208, %p209
      %p211 = scmp.ne.s32.totalorder %s203, %s206
      %p212 = scmp.eq.s32.totalorder %s21, 0
      %p213 = por %p211, %p212
      %p214 = scmp.ne.s32.totalorder %s203, %s206
      %p215 = scmp.eq.s32.totalorder %s26, 15
      %p216 = por %p214, %p215
      %p217 = scmp.ne.s32.totalorder %s206, %s207
      %p218 = scmp.eq.s32.totalorder %s26, 0
      %p219 = por %p217, %p218
      %p220 = scmp.ne.s32.totalorder %s206, %s207
      %p221 = scmp.eq.s32.totalorder %s27, 15
      %p222 = por %p220, %p221
      %p224 = scmp.ne.s32.totalorder %s207, %s223
      %p225 = scmp.eq.s32.totalorder %s27, 0
      %p226 = por %p224, %p225
      %s228 = sadd.s32 %s227, 1
      %p231 = scmp.eq.s32.totalorder %s21, 15
      %p232 = scmp.ne.s32.totalorder %s227, %s229
      %p233 = scmp.eq.s32.totalorder %s21, 0
      %p234 = por %p232, %p233
      %p235 = scmp.ne.s32.totalorder %s227, %s229
      %p236 = scmp.eq.s32.totalorder %s26, 15
      %p237 = por %p235, %p236
      %p238 = scmp.ne.s32.totalorder %s229, %s230
      %p239 = scmp.eq.s32.totalorder %s26, 0
      %p240 = por %p238, %p239
      %p241 = scmp.ne.s32.totalorder %s229, %s230
      %p242 = scmp.eq.s32.totalorder %s27, 15
      %p243 = por %p241, %p242
      %p245 = scmp.ne.s32.totalorder %s230, %s244
      %p246 = scmp.eq.s32.totalorder %s27, 0
      %p247 = por %p245, %p246
      %s249 = sadd.s32 %s248, 1
      %p252 = scmp.eq.s32.totalorder %s21, 15
      %p253 = scmp.ne.s32.totalorder %s248, %s250
      %p254 = scmp.eq.s32.totalorder %s21, 0
      %p255 = por %p253, %p254
      %p256 = scmp.ne.s32.totalorder %s248, %s250
      %p257 = scmp.eq.s32.totalorder %s26, 15
      %p258 = por %p256, %p257
      %p259 = scmp.ne.s32.totalorder %s250, %s251
      %p260 = scmp.eq.s32.totalorder %s26, 0
      %p261 = por %p259, %p260
      %p262 = scmp.ne.s32.totalorder %s250, %s251
      %p263 = scmp.eq.s32.totalorder %s27, 15
      %p264 = por %p262, %p263
      %p266 = scmp.ne.s32.totalorder %s251, %s265
      %p267 = scmp.eq.s32.totalorder %s27, 0
      %p268 = por %p266, %p267
      %s270 = sadd.s32 %s269, 1
      %p273 = scmp.eq.s32.totalorder %s21, 15
      %p274 = scmp.ne.s32.totalorder %s269, %s271
      %p275 = scmp.eq.s32.totalorder %s21, 0
      %p276 = por %p274, %p275
      %p277 = scmp.ne.s32.totalorder %s269, %s271
      %p278 = scmp.eq.s32.totalorder %s26, 15
      %p279 = por %p277, %p278
      %p280 = scmp.ne.s32.totalorder %s271, %s272
      %p281 = scmp.eq.s32.totalorder %s26, 0
      %p282 = por %p280, %p281
      %p283 = scmp.ne.s32.totalorder %s271, %s272
      %p284 = scmp.eq.s32.totalorder %s27, 15
      %p285 = por %p283, %p284
      %p287 = scmp.ne.s32.totalorder %s272, %s286
      %p288 = scmp.eq.s32.totalorder %s27, 0
      %p289 = por %p287, %p288
      %s291 = sadd.s32 %s290, 1
      %p294 = scmp.eq.s32.totalorder %s21, 15
      %p295 = scmp.ne.s32.totalorder %s290, %s292
      %p296 = scmp.eq.s32.totalorder %s21, 0
      %p297 = por %p295, %p296
      %p298 = scmp.ne.s32.totalorder %s290, %s292
      %p299 = scmp.eq.s32.totalorder %s26, 15
      %p300 = por %p298, %p299
      %p301 = scmp.ne.s32.totalorder %s292, %s293
      %p302 = scmp.eq.s32.totalorder %s26, 0
      %p303 = por %p301, %p302
      %p304 = scmp.ne.s32.totalorder %s292, %s293
      %p305 = scmp.eq.s32.totalorder %s27, 15
      %p306 = por %p304, %p305
      %p308 = scmp.ne.s32.totalorder %s293, %s307
      %p309 = scmp.eq.s32.totalorder %s27, 0
      %p310 = por %p308, %p309
      %s312 = sadd.s32 %s311, 1
      %p315 = scmp.eq.s32.totalorder %s21, 15
      %p316 = scmp.ne.s32.totalorder %s311, %s313
      %p317 = scmp.eq.s32.totalorder %s21, 0
      %p318 = por %p316, %p317
      %p319 = scmp.ne.s32.totalorder %s311, %s313
      %p320 = scmp.eq.s32.totalorder %s26, 15
      %p321 = por %p319, %p320
      %p322 = scmp.ne.s32.totalorder %s313, %s314
      %p323 = scmp.eq.s32.totalorder %s26, 0
      %p324 = por %p322, %p323
      %p325 = scmp.ne.s32.totalorder %s313, %s314
      %p326 = scmp.eq.s32.totalorder %s27, 15
      %p327 = por %p325, %p326
      %p329 = scmp.ne.s32.totalorder %s314, %s328
      %p330 = scmp.eq.s32.totalorder %s27, 0
      %p331 = por %p329, %p330
      %s332 = ssub.s32 %s28, %s47
      %s333 = ssub.s32 %s29, %s43
      %s334 = sor.u32 %s332, %s333
      %p335 = scmp.eq.s32.totalorder %s334, 0
      %s337 = sadd.s32 %s336, 1
      %s338 = scalar_select %p335, %s336, %s337
      %p341 = pneg %p335
      %p342 = scmp.eq.s32.totalorder %s21, 15
      %p343 = por %p341, %p342
      %p344 = scmp.ne.s32.totalorder %s336, %s339
      %p345 = scmp.eq.s32.totalorder %s21, 0
      %p346 = por %p344, %p345
      %p347 = scmp.ne.s32.totalorder %s336, %s339
      %p348 = scmp.eq.s32.totalorder %s26, 15
      %p349 = por %p347, %p348
      %p350 = scmp.ne.s32.totalorder %s339, %s340
      %p351 = scmp.eq.s32.totalorder %s26, 0
      %p352 = por %p350, %p351
      %p353 = scmp.ne.s32.totalorder %s339, %s340
      %p354 = scmp.eq.s32.totalorder %s27, 15
      %p355 = por %p353, %p354
      %p357 = scmp.ne.s32.totalorder %s340, %s356
      %p358 = scmp.eq.s32.totalorder %s27, 0
      %p359 = por %p357, %p358
      %p360 = scmp.le.s32.totalorder 1, %s21
      %p361 = scmp.lt.s32.totalorder %s21, 17
      %p362 = pnand %p360, %p361
      %p363 = pneg %p362
      // Predicated region
      $region9: #{tpu_custom_call.1} parent=5 // pred_check
        _
      $region10: #{tpu_custom_call.1} parent=5 // pred_check_branch
        %365 = sbr.rel (%p362) target = $region12
      $region11: #{tpu_custom_call.1} parent=5 // pred_region
        %s366 = ssub.s32 %s21, 1
        // Predicated region
        $region13: #{tpu_custom_call.1} parent=11 // pred_check
          %p367 = pneg %p141
        $region14: #{tpu_custom_call.1} parent=11 // pred_check_branch
          %369 = sbr.rel (%p367) target = $region16
        $region15: #{tpu_custom_call.1} parent=11 // pred_region
          _
        $region16: #{tpu_custom_call.1} parent=11 // pred_fallthru
          _
        // Predicated region
        $region17: #{tpu_custom_call.1} parent=11 // pred_check
          %p370 = pneg %p240
        $region18: #{tpu_custom_call.1} parent=11 // pred_check_branch
          %372 = sbr.rel (%p370) target = $region20
        $region19: #{tpu_custom_call.1} parent=11 // pred_region
          _
        $region20: #{tpu_custom_call.1} parent=11 // pred_fallthru
          _
        // Predicated region
        $region21: #{tpu_custom_call.1} parent=11 // pred_check
          %p373 = pneg %p261
        $region22: #{tpu_custom_call.1} parent=11 // pred_check_branch
          %375 = sbr.rel (%p373) target = $region24
        $region23: #{tpu_custom_call.1} parent=11 // pred_region
          _
        $region24: #{tpu_custom_call.1} parent=11 // pred_fallthru
          _
        // Predicated region
        $region25: #{tpu_custom_call.1} parent=11 // pred_check
          %p376 = pneg %p282
        $region26: #{tpu_custom_call.1} parent=11 // pred_check_branch
          %378 = sbr.rel (%p376) target = $region28
        $region27: #{tpu_custom_call.1} parent=11 // pred_region
          _
        $region28: #{tpu_custom_call.1} parent=11 // pred_fallthru
          _
        // Predicated region
        $region29: #{tpu_custom_call.1} parent=11 // pred_check
          %p379 = pneg %p303
        $region30: #{tpu_custom_call.1} parent=11 // pred_check_branch
          %381 = sbr.rel (%p379) target = $region32
        $region31: #{tpu_custom_call.1} parent=11 // pred_region
          _
        $region32: #{tpu_custom_call.1} parent=11 // pred_fallthru
          _
        // Predicated region
        $region33: #{tpu_custom_call.1} parent=11 // pred_check
          %p382 = pneg %p324
        $region34: #{tpu_custom_call.1} parent=11 // pred_check_branch
          %384 = sbr.rel (%p382) target = $region36
        $region35: #{tpu_custom_call.1} parent=11 // pred_region
          _
        $region36: #{tpu_custom_call.1} parent=11 // pred_fallthru
          _
      $region12: #{tpu_custom_call.1} parent=5 // pred_fallthru
        _
      %p385 = scmp.lt.s32.totalorder %s21, 16
      // Predicated region
      $region37: #{tpu_custom_call.1} parent=5 // pred_check
        %p386 = pneg %p385
      $region38: #{tpu_custom_call.1} parent=5 // pred_check_branch
        %388 = sbr.rel (%p386) target = $region40
      $region39: #{tpu_custom_call.1} parent=5 // pred_region
        // Predicated region
        $region41: #{tpu_custom_call.1} parent=39 // pred_check
          %p389 = pneg %p60
        $region42: #{tpu_custom_call.1} parent=39 // pred_check_branch
          %391 = sbr.rel (%p389) target = $region44
        $region43: #{tpu_custom_call.1} parent=39 // pred_region
          %p392 = scmp.lt.s32.totalorder %s28, 1
          %s393 = scalar_select %p392, %s28, 1
          %s394 = smul.addr %s393, 2
          %s395 = smul.addr %s394, 8
          %s396 = scalar_lea.vmem %s0, %s395
        $region44: #{tpu_custom_call.1} parent=39 // pred_fallthru
          _
        // Predicated region
        $region45: #{tpu_custom_call.1} parent=39 // pred_check
          %p397 = pneg %p88
        $region46: #{tpu_custom_call.1} parent=39 // pred_check_branch
          %399 = sbr.rel (%p397) target = $region48
        $region47: #{tpu_custom_call.1} parent=39 // pred_region
          %p400 = scmp.lt.s32.totalorder %s28, 1
          %s401 = scalar_select %p400, %s28, 1
          %p402 = scmp.lt.s32.totalorder %s29, 1
          %s403 = scalar_select %p402, %s29, 1
          %s404 = smul.addr %s401, 2
          %s405 = sadd.s32 %s403, %s404
          %s406 = smul.addr %s405, 8
          %s407 = scalar_lea.vmem %s1, %s406
        $region48: #{tpu_custom_call.1} parent=39 // pred_fallthru
          _
        // Predicated region
        $region49: #{tpu_custom_call.1} parent=39 // pred_check
          %p408 = pneg %p114
        $region50: #{tpu_custom_call.1} parent=39 // pred_check_branch
          %410 = sbr.rel (%p408) target = $region52
        $region51: #{tpu_custom_call.1} parent=39 // pred_region
          %p411 = scmp.lt.s32.totalorder %s28, 1
          %s412 = scalar_select %p411, %s28, 1
          %s413 = scalar_lea.vmem %s2, %s412
        $region52: #{tpu_custom_call.1} parent=39 // pred_fallthru
          _
        // Predicated region
        $region53: #{tpu_custom_call.1} parent=39 // pred_check
          %p414 = pneg %p161
        $region54: #{tpu_custom_call.1} parent=39 // pred_check_branch
          %416 = sbr.rel (%p414) target = $region56
        $region55: #{tpu_custom_call.1} parent=39 // pred_region
          %s417 = sand.u32 %s151, 1
          %s418 = sand.u32 %s151, 1
          %s419 = smul.addr %s418, 96
          %s420 = scalar_lea.vmem [#allocation5], %s419
          %s421 = smul.addr %s30, 4
          %s422 = smul.addr %s421, 8
          %s423 = scalar_lea.vmem %s4, %s422
          // Predicated region
          $region57: #{tpu_custom_call.1} parent=55 // pred_check
            _
          $region58: #{tpu_custom_call.1} parent=55 // pred_check_branch
            %425 = sbr.rel (0) target = $region60
          $region59: #{tpu_custom_call.1} parent=55 // pred_region
            // Predicated region
            $region61: #{tpu_custom_call.1} parent=59 // pred_check
              _
            $region62: #{tpu_custom_call.1} parent=59 // pred_check_branch
              %427 = sbr.rel (0) target = $region64
            $region63: #{tpu_custom_call.1} parent=59 // pred_region
              // Predicated region
              $region76: #{tpu_custom_call.1} parent=63 // pred_check
                _
              $region77: #{tpu_custom_call.1} parent=63 // pred_check_branch
                %465 = sbr.rel (0) target = $region79
              $region78: #{tpu_custom_call.1} parent=63 // pred_region
                loop: start=0, step=1, limit=1
                $region80: #{tpu_custom_call.1} parent=78 // loop_pre_header
                  _
                $region81: #{tpu_custom_call.1} parent=78 // loop_header
                  %s467 = sphi 0, %s471
                  %p468 = scmp.ge.s32.totalorder %s467, 1
                  %s472 = sphi %s423, %s423
                  %s473 = sphi %s420, %s420
                $region82: #{tpu_custom_call.1} parent=78 // loop_header_branch
                  %470 = sbr.rel (%p468) target = $region86
                $region83: #{tpu_custom_call.1} parent=78 // loop_body
                  %v474 = vld [vmem:[%s472] sm:$0xff]
                  %475 = vst [vmem:[%s473] sm:$0xff] %v474
                  %v476 = vld [vmem:[%s472 + $0x8] sm:$0xff]
                  %477 = vst [vmem:[%s473 + $0x8] sm:$0xff] %v476
                  %v478 = vld [vmem:[%s472 + $0x10] sm:$0xff]
                  %479 = vst [vmem:[%s473 + $0x10] sm:$0xff] %v478
                  %v480 = vld [vmem:[%s472 + $0x18] sm:$0xff]
                  %481 = vst [vmem:[%s473 + $0x18] sm:$0xff] %v480
                  %v482 = vld [vmem:[%s472 + $0x80] sm:$0xff]
                  %483 = vst [vmem:[%s473 + $0x20] sm:$0xff] %v482
                  %v484 = vld [vmem:[%s472 + $0x88] sm:$0xff]
                  %485 = vst [vmem:[%s473 + $0x28] sm:$0xff] %v484
                  %v486 = vld [vmem:[%s472 + $0x90] sm:$0xff]
                  %487 = vst [vmem:[%s473 + $0x30] sm:$0xff] %v486
                  %v488 = vld [vmem:[%s472 + $0x98] sm:$0xff]
                  %489 = vst [vmem:[%s473 + $0x38] sm:$0xff] %v488
                  %v490 = vld [vmem:[%s472 + $0x100] sm:$0xff]
                  %491 = vst [vmem:[%s473 + $0x40] sm:$0xff] %v490
                  %v492 = vld [vmem:[%s472 + $0x108] sm:$0xff]
                  %493 = vst [vmem:[%s473 + $0x48] sm:$0xff] %v492
                  %v494 = vld [vmem:[%s472 + $0x110] sm:$0xff]
                  %495 = vst [vmem:[%s473 + $0x50] sm:$0xff] %v494
                  %v496 = vld [vmem:[%s472 + $0x118] sm:$0xff]
                  %497 = vst [vmem:[%s473 + $0x58] sm:$0xff] %v496
                $region84: #{tpu_custom_call.1} parent=78 // loop_footer
                  %s471 = sadd.s32 1, %s467
                $region85: #{tpu_custom_call.1} parent=78 // loop_footer_branch
                  %466 = sbr.rel target = $region81
                $region86: #{tpu_custom_call.1} parent=78 // loop_exit
                  _
              $region79: #{tpu_custom_call.1} parent=63 // pred_fallthru
                _
              // Predicated region
              $region87: #{tpu_custom_call.1} parent=63 // pred_check
                _
              $region88: #{tpu_custom_call.1} parent=63 // pred_check_branch
                %499 = sbr.rel target = $region90
              $region89: #{tpu_custom_call.1} parent=63 // pred_region
                _
              $region90: #{tpu_custom_call.1} parent=63 // pred_fallthru
                _
            $region64: #{tpu_custom_call.1} parent=59 // pred_fallthru
              _
            // Predicated region
            $region65: #{tpu_custom_call.1} parent=59 // pred_check
              _
            $region66: #{tpu_custom_call.1} parent=59 // pred_check_branch
              %429 = sbr.rel target = $region68
            $region67: #{tpu_custom_call.1} parent=59 // pred_region
              %s431 = ssub.s32 256, 1
              loop: start=0, step=1, limit=1
              $region69: #{tpu_custom_call.1} parent=67 // loop_pre_header
                _
              $region70: #{tpu_custom_call.1} parent=67 // loop_header
                %s433 = sphi 0, %s437
                %p434 = scmp.ge.s32.totalorder %s433, 1
                %s438 = sphi %s423, %s423
                %s439 = sphi %s420, %s420
              $region71: #{tpu_custom_call.1} parent=67 // loop_header_branch
                %436 = sbr.rel (%p434) target = $region75
              $region72: #{tpu_custom_call.1} parent=67 // loop_body
                %v440 = vld [vmem:[%s438] sm:%s431]
                %441 = vst [vmem:[%s439] sm:%s431] %v440
                %v442 = vld [vmem:[%s438 + $0x8] sm:%s431]
                %443 = vst [vmem:[%s439 + $0x8] sm:%s431] %v442
                %v444 = vld [vmem:[%s438 + $0x10] sm:%s431]
                %445 = vst [vmem:[%s439 + $0x10] sm:%s431] %v444
                %v446 = vld [vmem:[%s438 + $0x18] sm:%s431]
                %447 = vst [vmem:[%s439 + $0x18] sm:%s431] %v446
                %v448 = vld [vmem:[%s438 + $0x80] sm:%s431]
                %449 = vst [vmem:[%s439 + $0x20] sm:%s431] %v448
                %v450 = vld [vmem:[%s438 + $0x88] sm:%s431]
                %451 = vst [vmem:[%s439 + $0x28] sm:%s431] %v450
                %v452 = vld [vmem:[%s438 + $0x90] sm:%s431]
                %453 = vst [vmem:[%s439 + $0x30] sm:%s431] %v452
                %v454 = vld [vmem:[%s438 + $0x98] sm:%s431]
                %455 = vst [vmem:[%s439 + $0x38] sm:%s431] %v454
                %v456 = vld [vmem:[%s438 + $0x100] sm:%s431]
                %457 = vst [vmem:[%s439 + $0x40] sm:%s431] %v456
                %v458 = vld [vmem:[%s438 + $0x108] sm:%s431]
                %459 = vst [vmem:[%s439 + $0x48] sm:%s431] %v458
                %v460 = vld [vmem:[%s438 + $0x110] sm:%s431]
                %461 = vst [vmem:[%s439 + $0x50] sm:%s431] %v460
                %v462 = vld [vmem:[%s438 + $0x118] sm:%s431]
                %463 = vst [vmem:[%s439 + $0x58] sm:%s431] %v462
              $region73: #{tpu_custom_call.1} parent=67 // loop_footer
                %s437 = sadd.s32 1, %s433
              $region74: #{tpu_custom_call.1} parent=67 // loop_footer_branch
                %432 = sbr.rel target = $region70
              $region75: #{tpu_custom_call.1} parent=67 // loop_exit
                _
            $region68: #{tpu_custom_call.1} parent=59 // pred_fallthru
              _
          $region60: #{tpu_custom_call.1} parent=55 // pred_fallthru
            _
          %500 = vnop
        $region56: #{tpu_custom_call.1} parent=39 // pred_fallthru
          _
        // Predicated region
        $region91: #{tpu_custom_call.1} parent=39 // pred_check
          %p501 = pneg %p187
        $region92: #{tpu_custom_call.1} parent=39 // pred_check_branch
          %503 = sbr.rel (%p501) target = $region94
        $region93: #{tpu_custom_call.1} parent=39 // pred_region
          %s504 = sand.u32 %s177, 1
          %s505 = sand.u32 %s177, 1
          %s506 = smul.addr %s505, 3
          %s507 = scalar_lea.vmem [#allocation6], %s506
          %s508 = scalar_lea.vmem %s5, %s30
          // Predicated region
          $region95: #{tpu_custom_call.1} parent=93 // pred_check
            _
          $region96: #{tpu_custom_call.1} parent=93 // pred_check_branch
            %510 = sbr.rel (0) target = $region98
          $region97: #{tpu_custom_call.1} parent=93 // pred_region
            // Predicated region
            $region99: #{tpu_custom_call.1} parent=97 // pred_check
              _
            $region100: #{tpu_custom_call.1} parent=97 // pred_check_branch
              %512 = sbr.rel target = $region102
            $region101: #{tpu_custom_call.1} parent=97 // pred_region
              // Predicated region
              $region114: #{tpu_custom_call.1} parent=101 // pred_check
                _
              $region115: #{tpu_custom_call.1} parent=101 // pred_check_branch
                %532 = sbr.rel (0) target = $region117
              $region116: #{tpu_custom_call.1} parent=101 // pred_region
                %s534 = ssub.s32 2, 1
                loop: start=0, step=1, limit=1
                $region118: #{tpu_custom_call.1} parent=116 // loop_pre_header
                  _
                $region119: #{tpu_custom_call.1} parent=116 // loop_header
                  %s536 = sphi 0, %s540
                  %p537 = scmp.ge.s32.totalorder %s536, 1
                  %s541 = sphi %s508, %s508
                  %s542 = sphi %s507, %s507
                $region120: #{tpu_custom_call.1} parent=116 // loop_header_branch
                  %539 = sbr.rel (%p537) target = $region124
                $region121: #{tpu_custom_call.1} parent=116 // loop_body
                  %v543 = vld [vmem:[%s541] sm:%s534]
                  %544 = vst [vmem:[%s542] sm:%s534] %v543
                  %v545 = vld [vmem:[%s541 + $0x4] sm:%s534]
                  %546 = vst [vmem:[%s542 + $0x1] sm:%s534] %v545
                  %v547 = vld [vmem:[%s541 + $0x8] sm:%s534]
                  %548 = vst [vmem:[%s542 + $0x2] sm:%s534] %v547
                $region122: #{tpu_custom_call.1} parent=116 // loop_footer
                  %s540 = sadd.s32 1, %s536
                $region123: #{tpu_custom_call.1} parent=116 // loop_footer_branch
                  %535 = sbr.rel target = $region119
                $region124: #{tpu_custom_call.1} parent=116 // loop_exit
                  _
              $region117: #{tpu_custom_call.1} parent=101 // pred_fallthru
                _
            $region102: #{tpu_custom_call.1} parent=97 // pred_fallthru
              _
            // Predicated region
            $region103: #{tpu_custom_call.1} parent=97 // pred_check
              _
            $region104: #{tpu_custom_call.1} parent=97 // pred_check_branch
              %514 = sbr.rel (0) target = $region106
            $region105: #{tpu_custom_call.1} parent=97 // pred_region
              %s516 = ssub.s32 2, 1
              loop: start=0, step=1, limit=1
              $region107: #{tpu_custom_call.1} parent=105 // loop_pre_header
                _
              $region108: #{tpu_custom_call.1} parent=105 // loop_header
                %s518 = sphi 0, %s522
                %p519 = scmp.ge.s32.totalorder %s518, 1
                %s523 = sphi %s508, %s508
                %s524 = sphi %s507, %s507
              $region109: #{tpu_custom_call.1} parent=105 // loop_header_branch
                %521 = sbr.rel (%p519) target = $region113
              $region110: #{tpu_custom_call.1} parent=105 // loop_body
                %v525 = vld [vmem:[%s523] sm:%s516]
                %526 = vst [vmem:[%s524] sm:%s516] %v525
                %v527 = vld [vmem:[%s523 + $0x4] sm:%s516]
                %528 = vst [vmem:[%s524 + $0x1] sm:%s516] %v527
                %v529 = vld [vmem:[%s523 + $0x8] sm:%s516]
                %530 = vst [vmem:[%s524 + $0x2] sm:%s516] %v529
              $region111: #{tpu_custom_call.1} parent=105 // loop_footer
                %s522 = sadd.s32 1, %s518
              $region112: #{tpu_custom_call.1} parent=105 // loop_footer_branch
                %517 = sbr.rel target = $region108
              $region113: #{tpu_custom_call.1} parent=105 // loop_exit
                _
            $region106: #{tpu_custom_call.1} parent=97 // pred_fallthru
              _
          $region98: #{tpu_custom_call.1} parent=93 // pred_fallthru
            _
          %549 = vnop
        $region94: #{tpu_custom_call.1} parent=39 // pred_fallthru
          _
        // Predicated region
        $region125: #{tpu_custom_call.1} parent=39 // pred_check
          %p550 = pneg %p213
        $region126: #{tpu_custom_call.1} parent=39 // pred_check_branch
          %552 = sbr.rel (%p550) target = $region128
        $region127: #{tpu_custom_call.1} parent=39 // pred_region
          %p553 = scmp.lt.s32.totalorder %s30, 3
          %s554 = scalar_select %p553, %s30, 3
          %s555 = smul.addr %s554, 8
          %s556 = scalar_lea.vmem %s6, %s555
        $region128: #{tpu_custom_call.1} parent=39 // pred_fallthru
          _
      $region40: #{tpu_custom_call.1} parent=5 // pred_fallthru
        _
      %p557 = scmp.le.s32.totalorder 1, %s21
      %p558 = scmp.lt.s32.totalorder %s21, 17
      %p559 = pnand %p557, %p558
      %p560 = pneg %p559
      // Predicated region
      $region129: #{tpu_custom_call.1} parent=5 // pred_check
        _
      $region130: #{tpu_custom_call.1} parent=5 // pred_check_branch
        %562 = sbr.rel (%p559) target = $region132
      $region131: #{tpu_custom_call.1} parent=5 // pred_region
        %s563 = ssub.s32 %s21, 1
        %s564 = sand.u32 %s154, 1
        %s565 = sand.u32 %s154, 1
        %s566 = smul.addr %s565, 96
        %s567 = scalar_lea.vmem [#allocation5], %s566
        // Predicated region
        $region133: #{tpu_custom_call.1} parent=131 // pred_check
          %p568 = pneg %p167
        $region134: #{tpu_custom_call.1} parent=131 // pred_check_branch
          %570 = sbr.rel (%p568) target = $region136
        $region135: #{tpu_custom_call.1} parent=131 // pred_region
          _
        $region136: #{tpu_custom_call.1} parent=131 // pred_fallthru
          _
        %s571 = sand.u32 %s180, 1
        %s572 = sand.u32 %s180, 1
        %s573 = smul.addr %s572, 3
        %s574 = scalar_lea.vmem [#allocation6], %s573
        // Predicated region
        $region137: #{tpu_custom_call.1} parent=131 // pred_check
          %p575 = pneg %p193
        $region138: #{tpu_custom_call.1} parent=131 // pred_check_branch
          %577 = sbr.rel (%p575) target = $region140
        $region139: #{tpu_custom_call.1} parent=131 // pred_region
          _
        $region140: #{tpu_custom_call.1} parent=131 // pred_fallthru
          _
        %p578 = scmp.lt.s32.totalorder %s31, 1
        %s579 = scalar_select %p578, %s31, 1
        %s580 = smul.addr %s579, 2
        %s581 = smul.addr %s580, 8
        %s582 = scalar_lea.vmem %s0, %s581
        %p583 = pneg %p66
        %p584 = pneg %p63
        %p585 = scmp.lt.s32.totalorder %s31, 1
        %s586 = scalar_select %p585, %s31, 1
        %p587 = scmp.lt.s32.totalorder %s32, 1
        %s588 = scalar_select %p587, %s32, 1
        %s589 = smul.addr %s586, 2
        %s590 = sadd.s32 %s588, %s589
        %s591 = smul.addr %s590, 8
        %s592 = scalar_lea.vmem %s1, %s591
        %p593 = pneg %p94
        %p594 = pneg %p91
        %p595 = scmp.lt.s32.totalorder %s31, 1
        %s596 = scalar_select %p595, %s31, 1
        %s597 = scalar_lea.vmem %s2, %s596
        %p598 = pneg %p120
        %p599 = pneg %p117
        %p600 = pneg %p141
        %p601 = pneg %p138
        %s602 = sand.u32 %s154, 1
        %s603 = sand.u32 %s154, 1
        %s604 = smul.addr %s603, 96
        %s605 = scalar_lea.vmem [#allocation5], %s604
        %p606 = pneg %p167
        %p607 = pneg %p164
        %s608 = sand.u32 %s180, 1
        %s609 = sand.u32 %s180, 1
        %s610 = smul.addr %s609, 3
        %s611 = scalar_lea.vmem [#allocation6], %s610
        %p612 = pneg %p193
        %p613 = pneg %p190
        %p614 = scmp.lt.s32.totalorder %s33, 3
        %s615 = scalar_select %p614, %s33, 3
        %s616 = smul.addr %s615, 8
        %s617 = scalar_lea.vmem %s6, %s616
        %p618 = pneg %p219
        %p619 = pneg %p216
        %p620 = pneg %p240
        %p621 = pneg %p237
        %p622 = pneg %p261
        %p623 = pneg %p258
        %p624 = pneg %p282
        %p625 = pneg %p279
        %p626 = pneg %p303
        %p627 = pneg %p300
        %p628 = pneg %p324
        %p629 = pneg %p321
        %p630 = pneg %p352
        %p631 = pneg %p349
        %s632 = sand.u32 %s339, 1
        %s633 = scalar_lea.sflag [#allocation8], %s632
        %s634 = sand.u32 %s339, 1
        %s635 = smul.addr %s634, 8
        %s636 = scalar_lea.vmem [#allocation7], %s635
        %p637 = scmp.lt.s32.totalorder %s31, 1
        %s638 = scalar_select %p637, %s31, 1
        %s639 = smul.addr %s638, 2
        %s640 = smul.addr %s639, 8
        %s641 = scalar_lea.vmem %s0, %s640
        %p642 = scmp.lt.s32.totalorder %s31, 1
        %s643 = scalar_select %p642, %s31, 1
        %p644 = scmp.lt.s32.totalorder %s32, 1
        %s645 = scalar_select %p644, %s32, 1
        %s646 = smul.addr %s643, 2
        %s647 = sadd.s32 %s645, %s646
        %s648 = smul.addr %s647, 8
        %s649 = scalar_lea.vmem %s1, %s648
        %p650 = scmp.lt.s32.totalorder %s31, 1
        %s651 = scalar_select %p650, %s31, 1
        %s652 = scalar_lea.vmem %s2, %s651
        %p653 = scmp.lt.s32.totalorder %s33, 3
        %s654 = scalar_select %p653, %s33, 3
        %s655 = smul.addr %s654, 8
        %s656 = scalar_lea.vmem %s6, %s655
        %v657 = vld [vmem:[%s649] sm:$0xff]
        %v658 = vld [vmem:[%s652] sm:$0x1]
        %v659 = vld [vmem:[%s3] sm:$0x1]
        %v660 = vld [vmem:[%s3 + $0x1] sm:$0x1]
        %v661 = vld [vmem:[%s3 + $0x2] sm:$0x1]
        %v662 = vld [vmem:[%s3 + $0x3] sm:$0x1]
        %v663 = vld [vmem:[%s567] sm:$0xff]
        %v664 = vld [vmem:[%s567 + $0x8] sm:$0xff]
        %v665 = vld [vmem:[%s567 + $0x10] sm:$0xff]
        %v666 = vld [vmem:[%s567 + $0x18] sm:$0xff]
        %s667 = scalar_lea.vmem %s567, 32 [#allocation5]
        %v668 = vld [vmem:[%s667] sm:$0xff]
        %v669 = vld [vmem:[%s667 + $0x8] sm:$0xff]
        %v670 = vld [vmem:[%s667 + $0x10] sm:$0xff]
        %v671 = vld [vmem:[%s667 + $0x18] sm:$0xff]
        %s672 = scalar_lea.vmem %s567, 64 [#allocation5]
        %v673 = vld [vmem:[%s672] sm:$0xff]
        %v674 = vld [vmem:[%s672 + $0x8] sm:$0xff]
        %v675 = vld [vmem:[%s672 + $0x10] sm:$0xff]
        %v676 = vld [vmem:[%s672 + $0x18] sm:$0xff]
        %v677 = vld [vmem:[%s574] sm:$0x1]
        %s678 = scalar_lea.vmem %s574, 1 [#allocation6]
        %v679 = vld [vmem:[%s678] sm:$0x1]
        %s680 = scalar_lea.vmem %s574, 2 [#allocation6]
        %v681 = vld [vmem:[%s680] sm:$0x1]
        %p682 = scmp.eq.s32.totalorder %s33, 0
        // Predicated region
        $region141: #{tpu_custom_call.1} parent=131 // pred_check
          %p683 = pneg %p682
        $region142: #{tpu_custom_call.1} parent=131 // pred_check_branch
          %685 = sbr.rel (%p683) target = $region144
        $region143: #{tpu_custom_call.1} parent=131 // pred_region
          %vm686 = vcmask 261120
          %687 = vst.msk [vmem:[#allocation4] sm:$0xff] %vm686, 0.0
        $region144: #{tpu_custom_call.1} parent=131 // pred_fallthru
          _
        %p688 = scmp.eq.s32.totalorder %s32, 0
        // Predicated region
        $region145: #{tpu_custom_call.1} parent=131 // pred_check
          %p689 = pneg %p688
        $region146: #{tpu_custom_call.1} parent=131 // pred_check_branch
          %691 = sbr.rel (%p689) target = $region148
        $region147: #{tpu_custom_call.1} parent=131 // pred_region
          %v692 = vld [vmem:[%s641] sm:$0xff]
          %v693 = vld [vmem:[%s641 + $0x8] sm:$0xff]
          %vm694 = vcmask 261120
          %v695 = vsel %vm694, %v692, 0.0
          %696 = vadd.xlane.f32.xlu0 %v695
          %v697 = vpop.xlane.xlu0 %696
          %v698 = vsel %vm694, %v693, 0.0
          %699 = vadd.xlane.f32.xlu0 %v698
          %v700 = vpop.xlane.xlu0 %699
          %v701 = vmul.f32 %v692, %v692
          %v702 = vmul.f32 %v693, %v693
          %v703 = vsel %vm694, %v701, 0.0
          %704 = vadd.xlane.f32.xlu0 %v703
          %v705 = vpop.xlane.xlu0 %704
          %v706 = vsel %vm694, %v702, 0.0
          %707 = vadd.xlane.f32.xlu0 %v706
          %v708 = vpop.xlane.xlu0 %707
          %v709 = vmul.f32 %v697, 0.03125
          %v710 = vmul.f32 %v700, 0.03125
          %v711 = vmul.f32 %v697, %v709
          %v712 = vmul.f32 %v700, %v710
          %v713 = vsub.f32 %v705, %v711
          %v714 = vsub.f32 %v708, %v712
          %v715 = vmul.f32 %v713, 0.032258064
          %v716 = vmul.f32 %v714, 0.032258064
          %v717 = vmax.f32 %v715, 0.0
          %v718 = vmax.f32 %v716, 0.0
          %v719 = vrsqrt.pop %v717
          %v720 = vmul.f32 %v717, %v719
          %vm721 = vcmp.eq.f32.partialorder %v717, inf
          %v722 = vsel %vm721, %v717, %v720
          %vm723 = vcmp.eq.f32.partialorder %v717, 0.0
          %v724 = vand.u32 %v717, 2147483648
          %v725 = vsel %vm723, %v724, %v722
          %v726 = vrsqrt.pop %v718
          %v727 = vmul.f32 %v718, %v726
          %vm728 = vcmp.eq.f32.partialorder %v718, inf
          %v729 = vsel %vm728, %v718, %v727
          %vm730 = vcmp.eq.f32.partialorder %v718, 0.0
          %v731 = vand.u32 %v718, 2147483648
          %v732 = vsel %vm730, %v731, %v729
          %v733 = vadd.f32 %v725, 1e-06
          %v734 = vadd.f32 %v732, 1e-06
          %v735 = vrcp.pop %v733
          %v736 = vmul.f32 1.0, %v735
          %v737 = vrcp.pop %v734
          %v738 = vmul.f32 1.0, %v737
          %v739 = vsub.f32 %v692, %v709
          %v740 = vsub.f32 %v693, %v710
          %v741 = vmul.f32 %v739, %v736
          %v742 = vmul.f32 %v740, %v738
          %v743 = vlaneseq
          %v744 = vshrl.u32 %v743, 7
          %v745 = vsub.s32 0, %v744
          %v746 = vrot.slane %v659, %v745
          %v747 = vmul.f32 %v746, %v741
          %v748 = vmul.f32 %v746, %v742
          %v749 = vlaneseq
          %v750 = vshrl.u32 %v749, 7
          %v751 = vsub.s32 0, %v750
          %v752 = vrot.slane %v660, %v751
          %v753 = vadd.f32 %v747, %v752
          %v754 = vadd.f32 %v748, %v752
          %v756 = vlaneseq
          %v757 = vshrl.u32 %v756, 7
          %v758 = vsub.s32 0, %v757
          %v759 = vrot.slane %v679, %v758
          %v762 = vsel %vm694, %v753, 0
          %v765 = vsel %vm694, %v754, 0
          %767 = vmatprep.subr.mxu0 0.0
          %768 = vmatpush1.msra.mxu0 0.0
          %769 = vmatprep.subr.mxu0 0.0
          %770 = vmatpush1.msra.mxu0 0.0
          %771 = vmatprep.subr.mxu0 0.0
          %772 = vmatpush1.msra.mxu0 0.0
          %773 = vmatprep.subr.mxu0 0.0
          %774 = vmatpush1.msra.mxu0 0.0
          %775 = vmatprep.subr.mxu0 0.0
          %776 = vmatpush1.msra.mxu0 0.0
          %777 = vmatprep.subr.mxu0 0.0
          %778 = vmatpush1.msra.mxu0 0.0
          %779 = vmatprep.subr.mxu0 0.0
          %780 = vmatpush1.msra.mxu0 0.0
          %781 = vmatprep.subr.mxu0 0.0
          %782 = vmatpush1.msra.mxu0 0.0
          %783 = vmatprep.subr.mxu0 0.0
          %784 = vmatpush1.msra.mxu0 0.0
          %785 = vmatprep.subr.mxu0 0.0
          %786 = vmatpush1.msra.mxu0 0.0
          %787 = vmatprep.subr.mxu0 0.0
          %788 = vmatpush1.msra.mxu0 0.0
          %789 = vmatprep.subr.mxu0 0.0
          %790 = vmatpush1.msra.mxu0 0.0
          %791 = vmatprep.subr.mxu0 0.0
          %792 = vmatpush1.msra.mxu0 %v671
          %793 = vmatprep.subr.mxu0 0.0
          %794 = vmatpush1.msra.mxu0 %v670
          %795 = vmatprep.subr.mxu0 0.0
          %796 = vmatpush1.msra.mxu0 %v669
          %797 = vmatprep.subr.mxu0 0.0
          %798 = vmatpush1.msra.mxu0 %v668
          %799 = vmatprep.subr.mxu0 0.0
          %800 = vmatpush2.msra.mxu0 0.0
          %801 = vmatprep.subr.mxu0 0.0
          %802 = vmatpush2.msra.mxu0 0.0
          %803 = vmatprep.subr.mxu0 0.0
          %804 = vmatpush2.msra.mxu0 0.0
          %805 = vmatprep.subr.mxu0 0.0
          %806 = vmatpush2.msra.mxu0 0.0
          %807 = vmatprep.subr.mxu0 0.0
          %808 = vmatpush2.msra.mxu0 0.0
          %809 = vmatprep.subr.mxu0 0.0
          %810 = vmatpush2.msra.mxu0 0.0
          %811 = vmatprep.subr.mxu0 0.0
          %812 = vmatpush2.msra.mxu0 0.0
          %813 = vmatprep.subr.mxu0 0.0
          %814 = vmatpush2.msra.mxu0 0.0
          %815 = vmatprep.subr.mxu0 0.0
          %816 = vmatpush2.msra.mxu0 0.0
          %817 = vmatprep.subr.mxu0 0.0
          %818 = vmatpush2.msra.mxu0 0.0
          %819 = vmatprep.subr.mxu0 0.0
          %820 = vmatpush2.msra.mxu0 0.0
          %821 = vmatprep.subr.mxu0 0.0
          %822 = vmatpush2.msra.mxu0 0.0
          %823 = vmatprep.subr.mxu0 0.0
          %824 = vmatpush2.msra.mxu0 0.0
          %825 = vmatprep.subr.mxu0 0.0
          %826 = vmatpush2.msra.mxu0 0.0
          %827 = vmatprep.subr.mxu0 0.0
          %828 = vmatpush2.msra.mxu0 0.0
          %829 = vmatprep.subr.mxu0 0.0
          %830 = vmatpush2.msra.mxu0 0.0
          %831 = vmatprep.mubr.f32.mxu0 0.0
          %832 = vmatmul.mubr.f32.gmra.mxu0 %v762
          %v833 = vpop.f32.mrf.mxu0
          %v834 = vadd.f32 %v759, %v833
          %v835 = vpop.f32.mrf.mxu0
          %836 = vmatprep.mubr.f32.mxu0 0.0
          %837 = vmatmul.mubr.f32.gmra.mxu0 %v765
          %v838 = vpop.f32.mrf.mxu0
          %v839 = vadd.f32 %v759, %v838
          %v840 = vpop.f32.mrf.mxu0
          %841 = vdwg.mxu0
          %s842 = smul.u32 %s33, 16
          %s843 = scalar_lea.vmem [#allocation2], %s842
          %vm844 = vcmask 64512
          %845 = vst.msk [vmem:[%s843] sm:$0xff] %vm844, %v834
          %846 = vst.msk [vmem:[%s843 + $0x8] sm:$0xff] %vm844, %v839
          %v848 = vlaneseq
          %v849 = vshrl.u32 %v848, 7
          %v850 = vsub.s32 0, %v849
          %v851 = vrot.slane %v681, %v850
          %853 = vmatprep.subr.mxu0 0.0
          %854 = vmatpush1.msra.mxu0 0.0
          %855 = vmatprep.subr.mxu0 0.0
          %856 = vmatpush1.msra.mxu0 0.0
          %857 = vmatprep.subr.mxu0 0.0
          %858 = vmatpush1.msra.mxu0 0.0
          %859 = vmatprep.subr.mxu0 0.0
          %860 = vmatpush1.msra.mxu0 0.0
          %861 = vmatprep.subr.mxu0 0.0
          %862 = vmatpush1.msra.mxu0 0.0
          %863 = vmatprep.subr.mxu0 0.0
          %864 = vmatpush1.msra.mxu0 0.0
          %865 = vmatprep.subr.mxu0 0.0
          %866 = vmatpush1.msra.mxu0 0.0
          %867 = vmatprep.subr.mxu0 0.0
          %868 = vmatpush1.msra.mxu0 0.0
          %869 = vmatprep.subr.mxu0 0.0
          %870 = vmatpush1.msra.mxu0 0.0
          %871 = vmatprep.subr.mxu0 0.0
          %872 = vmatpush1.msra.mxu0 0.0
          %873 = vmatprep.subr.mxu0 0.0
          %874 = vmatpush1.msra.mxu0 0.0
          %875 = vmatprep.subr.mxu0 0.0
          %876 = vmatpush1.msra.mxu0 0.0
          %877 = vmatprep.subr.mxu0 0.0
          %878 = vmatpush1.msra.mxu0 %v676
          %879 = vmatprep.subr.mxu0 0.0
          %880 = vmatpush1.msra.mxu0 %v675
          %881 = vmatprep.subr.mxu0 0.0
          %882 = vmatpush1.msra.mxu0 %v674
          %883 = vmatprep.subr.mxu0 0.0
          %884 = vmatpush1.msra.mxu0 %v673
          %885 = vmatprep.subr.mxu0 0.0
          %886 = vmatpush2.msra.mxu0 0.0
          %887 = vmatprep.subr.mxu0 0.0
          %888 = vmatpush2.msra.mxu0 0.0
          %889 = vmatprep.subr.mxu0 0.0
          %890 = vmatpush2.msra.mxu0 0.0
          %891 = vmatprep.subr.mxu0 0.0
          %892 = vmatpush2.msra.mxu0 0.0
          %893 = vmatprep.subr.mxu0 0.0
          %894 = vmatpush2.msra.mxu0 0.0
          %895 = vmatprep.subr.mxu0 0.0
          %896 = vmatpush2.msra.mxu0 0.0
          %897 = vmatprep.subr.mxu0 0.0
          %898 = vmatpush2.msra.mxu0 0.0
          %899 = vmatprep.subr.mxu0 0.0
          %900 = vmatpush2.msra.mxu0 0.0
          %901 = vmatprep.subr.mxu0 0.0
          %902 = vmatpush2.msra.mxu0 0.0
          %903 = vmatprep.subr.mxu0 0.0
          %904 = vmatpush2.msra.mxu0 0.0
          %905 = vmatprep.subr.mxu0 0.0
          %906 = vmatpush2.msra.mxu0 0.0
          %907 = vmatprep.subr.mxu0 0.0
          %908 = vmatpush2.msra.mxu0 0.0
          %909 = vmatprep.subr.mxu0 0.0
          %910 = vmatpush2.msra.mxu0 0.0
          %911 = vmatprep.subr.mxu0 0.0
          %912 = vmatpush2.msra.mxu0 0.0
          %913 = vmatprep.subr.mxu0 0.0
          %914 = vmatpush2.msra.mxu0 0.0
          %915 = vmatprep.subr.mxu0 0.0
          %916 = vmatpush2.msra.mxu0 0.0
          %917 = vmatprep.mubr.f32.mxu0 0.0
          %918 = vmatmul.mubr.f32.gmra.mxu0 %v762
          %v919 = vpop.f32.mrf.mxu0
          %v920 = vadd.f32 %v851, %v919
          %v921 = vpop.f32.mrf.mxu0
          %922 = vmatprep.mubr.f32.mxu0 0.0
          %923 = vmatmul.mubr.f32.gmra.mxu0 %v765
          %v924 = vpop.f32.mrf.mxu0
          %v925 = vadd.f32 %v851, %v924
          %v926 = vpop.f32.mrf.mxu0
          %927 = vdwg.mxu0
          %s928 = scalar_lea.vmem [#allocation3], %s842
          %929 = vst.msk [vmem:[%s928] sm:$0xff] %vm844, %v920
          %930 = vst.msk [vmem:[%s928 + $0x8] sm:$0xff] %vm844, %v925
        $region148: #{tpu_custom_call.1} parent=131 // pred_fallthru
          _
        %s931 = smul.u32 %s33, 16
        %s932 = scalar_lea.vmem [#allocation2], %s931
        %v933 = vld [vmem:[%s932] sm:$0xff]
        %v934 = vld [vmem:[%s932 + $0x8] sm:$0xff]
        %s935 = scalar_lea.vmem [#allocation3], %s931
        %v936 = vld [vmem:[%s935] sm:$0xff]
        %v937 = vld [vmem:[%s935 + $0x8] sm:$0xff]
        %vm938 = vcmask 261120
        %v939 = vsel %vm938, %v657, 0.0
        %940 = vadd.xlane.f32.xlu0 %v939
        %v941 = vpop.xlane.xlu0 %940
        %v942 = vmul.f32 %v657, %v657
        %v943 = vsel %vm938, %v942, 0.0
        %944 = vadd.xlane.f32.xlu0 %v943
        %v945 = vpop.xlane.xlu0 %944
        %v946 = vmul.f32 %v941, 0.03125
        %v947 = vmul.f32 %v941, %v946
        %v948 = vsub.f32 %v945, %v947
        %v949 = vmul.f32 %v948, 0.032258064
        %v950 = vmax.f32 %v949, 0.0
        %v951 = vrsqrt.pop %v950
        %v952 = vmul.f32 %v950, %v951
        %vm953 = vcmp.eq.f32.partialorder %v950, inf
        %v954 = vsel %vm953, %v950, %v952
        %vm955 = vcmp.eq.f32.partialorder %v950, 0.0
        %v956 = vand.u32 %v950, 2147483648
        %v957 = vsel %vm955, %v956, %v954
        %v958 = vadd.f32 %v957, 1e-06
        %v959 = vrcp.pop %v958
        %v960 = vmul.f32 1.0, %v959
        %v961 = vsub.f32 %v657, %v946
        %v962 = vmul.f32 %v961, %v960
        %v963 = vlaneseq
        %v964 = vshrl.u32 %v963, 7
        %v965 = vsub.s32 0, %v964
        %v966 = vrot.slane %v659, %v965
        %v967 = vmul.f32 %v966, %v962
        %v968 = vlaneseq
        %v969 = vshrl.u32 %v968, 7
        %v970 = vsub.s32 0, %v969
        %v971 = vrot.slane %v660, %v970
        %v972 = vadd.f32 %v967, %v971
        %v974 = vlaneseq
        %v975 = vshrl.u32 %v974, 7
        %v976 = vsub.s32 0, %v975
        %v977 = vrot.slane %v677, %v976
        %v980 = vsel %vm938, %v972, 0
        %982 = vmatprep.subr.mxu0 0.0
        %983 = vmatpush1.msra.mxu0 0.0
        %984 = vmatprep.subr.mxu0 0.0
        %985 = vmatpush1.msra.mxu0 0.0
        %986 = vmatprep.subr.mxu0 0.0
        %987 = vmatpush1.msra.mxu0 0.0
        %988 = vmatprep.subr.mxu0 0.0
        %989 = vmatpush1.msra.mxu0 0.0
        %990 = vmatprep.subr.mxu0 0.0
        %991 = vmatpush1.msra.mxu0 0.0
        %992 = vmatprep.subr.mxu0 0.0
        %993 = vmatpush1.msra.mxu0 0.0
        %994 = vmatprep.subr.mxu0 0.0
        %995 = vmatpush1.msra.mxu0 0.0
        %996 = vmatprep.subr.mxu0 0.0
        %997 = vmatpush1.msra.mxu0 0.0
        %998 = vmatprep.subr.mxu0 0.0
        %999 = vmatpush1.msra.mxu0 0.0
        %1000 = vmatprep.subr.mxu0 0.0
        %1001 = vmatpush1.msra.mxu0 0.0
        %1002 = vmatprep.subr.mxu0 0.0
        %1003 = vmatpush1.msra.mxu0 0.0
        %1004 = vmatprep.subr.mxu0 0.0
        %1005 = vmatpush1.msra.mxu0 0.0
        %1006 = vmatprep.subr.mxu0 0.0
        %1007 = vmatpush1.msra.mxu0 %v666
        %1008 = vmatprep.subr.mxu0 0.0
        %1009 = vmatpush1.msra.mxu0 %v665
        %1010 = vmatprep.subr.mxu0 0.0
        %1011 = vmatpush1.msra.mxu0 %v664
        %1012 = vmatprep.subr.mxu0 0.0
        %1013 = vmatpush1.msra.mxu0 %v663
        %1014 = vmatprep.subr.mxu0 0.0
        %1015 = vmatpush2.msra.mxu0 0.0
        %1016 = vmatprep.subr.mxu0 0.0
        %1017 = vmatpush2.msra.mxu0 0.0
        %1018 = vmatprep.subr.mxu0 0.0
        %1019 = vmatpush2.msra.mxu0 0.0
        %1020 = vmatprep.subr.mxu0 0.0
        %1021 = vmatpush2.msra.mxu0 0.0
        %1022 = vmatprep.subr.mxu0 0.0
        %1023 = vmatpush2.msra.mxu0 0.0
        %1024 = vmatprep.subr.mxu0 0.0
        %1025 = vmatpush2.msra.mxu0 0.0
        %1026 = vmatprep.subr.mxu0 0.0
        %1027 = vmatpush2.msra.mxu0 0.0
        %1028 = vmatprep.subr.mxu0 0.0
        %1029 = vmatpush2.msra.mxu0 0.0
        %1030 = vmatprep.subr.mxu0 0.0
        %1031 = vmatpush2.msra.mxu0 0.0
        %1032 = vmatprep.subr.mxu0 0.0
        %1033 = vmatpush2.msra.mxu0 0.0
        %1034 = vmatprep.subr.mxu0 0.0
        %1035 = vmatpush2.msra.mxu0 0.0
        %1036 = vmatprep.subr.mxu0 0.0
        %1037 = vmatpush2.msra.mxu0 0.0
        %1038 = vmatprep.subr.mxu0 0.0
        %1039 = vmatpush2.msra.mxu0 0.0
        %1040 = vmatprep.subr.mxu0 0.0
        %1041 = vmatpush2.msra.mxu0 0.0
        %1042 = vmatprep.subr.mxu0 0.0
        %1043 = vmatpush2.msra.mxu0 0.0
        %1044 = vmatprep.subr.mxu0 0.0
        %1045 = vmatpush2.msra.mxu0 0.0
        %1046 = vmatprep.mubr.f32.mxu0 0.0
        %1047 = vmatmul.mubr.f32.gmra.mxu0 %v980
        %v1048 = vpop.f32.mrf.mxu0
        %v1049 = vadd.f32 %v977, %v1048
        %v1050 = vpop.f32.mrf.mxu0
        %1051 = vdwg.mxu0
        %v1053 = vlaneseq
        %v1054 = vshrl.u32 %v1053, 7
        %v1055 = vsub.s32 0, %v1054
        %v1056 = vrot.slane %v658, %v1055
        %vm1058 = vcmask 64512
        %v1060 = vsel %vm1058, %v1049, 0
        %v1063 = vsel %vm1058, %v933, 0
        %v1066 = vsel %vm1058, %v934, 0
        %1068 = vmatprep.subr.mxu0 0.0
        %1069 = vmatpush1.xpose.msra.mxu0 0.0
        %1070 = vmatprep.subr.mxu0 0.0
        %1071 = vmatpush1.xpose.msra.mxu0 0.0
        %1072 = vmatprep.subr.mxu0 0.0
        %1073 = vmatpush1.xpose.msra.mxu0 0.0
        %1074 = vmatprep.subr.mxu0 0.0
        %1075 = vmatpush1.xpose.msra.mxu0 0.0
        %1076 = vmatprep.subr.mxu0 0.0
        %1077 = vmatpush1.xpose.msra.mxu0 0.0
        %1078 = vmatprep.subr.mxu0 0.0
        %1079 = vmatpush1.xpose.msra.mxu0 0.0
        %1080 = vmatprep.subr.mxu0 0.0
        %1081 = vmatpush1.xpose.msra.mxu0 0.0
        %1082 = vmatprep.subr.mxu0 0.0
        %1083 = vmatpush1.xpose.msra.mxu0 0.0
        %1084 = vmatprep.subr.mxu0 0.0
        %1085 = vmatpush1.xpose.msra.mxu0 0.0
        %1086 = vmatprep.subr.mxu0 0.0
        %1087 = vmatpush1.xpose.msra.mxu0 0.0
        %1088 = vmatprep.subr.mxu0 0.0
        %1089 = vmatpush1.xpose.msra.mxu0 0.0
        %1090 = vmatprep.subr.mxu0 0.0
        %1091 = vmatpush1.xpose.msra.mxu0 0.0
        %1092 = vmatprep.subr.mxu0 0.0
        %1093 = vmatpush1.xpose.msra.mxu0 0.0
        %1094 = vmatprep.subr.mxu0 0.0
        %1095 = vmatpush1.xpose.msra.mxu0 0.0
        %1096 = vmatprep.subr.mxu0 0.0
        %1097 = vmatpush1.xpose.msra.mxu0 %v1066
        %1098 = vmatprep.subr.mxu0 0.0
        %1099 = vmatpush1.xpose.msra.mxu0 %v1063
        %1100 = vmatprep.subr.mxu0 0.0
        %1101 = vmatpush2.xpose.msra.mxu0 0.0
        %1102 = vmatprep.subr.mxu0 0.0
        %1103 = vmatpush2.xpose.msra.mxu0 0.0
        %1104 = vmatprep.subr.mxu0 0.0
        %1105 = vmatpush2.xpose.msra.mxu0 0.0
        %1106 = vmatprep.subr.mxu0 0.0
        %1107 = vmatpush2.xpose.msra.mxu0 0.0
        %1108 = vmatprep.subr.mxu0 0.0
        %1109 = vmatpush2.xpose.msra.mxu0 0.0
        %1110 = vmatprep.subr.mxu0 0.0
        %1111 = vmatpush2.xpose.msra.mxu0 0.0
        %1112 = vmatprep.subr.mxu0 0.0
        %1113 = vmatpush2.xpose.msra.mxu0 0.0
        %1114 = vmatprep.subr.mxu0 0.0
        %1115 = vmatpush2.xpose.msra.mxu0 0.0
        %1116 = vmatprep.subr.mxu0 0.0
        %1117 = vmatpush2.xpose.msra.mxu0 0.0
        %1118 = vmatprep.subr.mxu0 0.0
        %1119 = vmatpush2.xpose.msra.mxu0 0.0
        %1120 = vmatprep.subr.mxu0 0.0
        %1121 = vmatpush2.xpose.msra.mxu0 0.0
        %1122 = vmatprep.subr.mxu0 0.0
        %1123 = vmatpush2.xpose.msra.mxu0 0.0
        %1124 = vmatprep.subr.mxu0 0.0
        %1125 = vmatpush2.xpose.msra.mxu0 0.0
        %1126 = vmatprep.subr.mxu0 0.0
        %1127 = vmatpush2.xpose.msra.mxu0 0.0
        %1128 = vmatprep.subr.mxu0 0.0
        %1129 = vmatpush2.xpose.msra.mxu0 0.0
        %1130 = vmatprep.subr.mxu0 0.0
        %1131 = vmatpush2.xpose.msra.mxu0 0.0
        %1132 = vmatprep.mubr.f32.mxu0 0.0
        %1133 = vmatmul.mubr.f32.gmra.mxu0 %v1060
        %v1134 = vpop.f32.mrf.mxu0
        %v1135 = vadd.f32 %v1056, %v1134
        %v1136 = vpop.f32.mrf.mxu0
        %1137 = vdwg.mxu0
        %vm1138 = vcmask 130048
        %v1139 = vsel %vm1138, %v1135, -inf
        %1140 = vmax.xlane.f32.xlu0 %v1139
        %v1141 = vpop.xlane.xlu0 %1140
        %v1142 = vsub.f32 %v1135, %v1141
        %v1143 = vmul.f32 %v1142, 1.442695
        %v1144 = vpow.pop %v1143
        %v1145 = vsel %vm1138, %v1144, 0.0
        %1146 = vadd.xlane.f32.xlu0 %v1145
        %v1147 = vpop.xlane.xlu0 %1146
        %v1148 = vrcp.pop %v1147
        %v1149 = vmul.f32 %v1144, %v1148
        %v1151 = vsel %vm1138, %v1149, 0
        %1153 = vmatprep.subr.mxu0 0.0
        %1154 = vmatpush1.msra.mxu0 0.0
        %1155 = vmatprep.subr.mxu0 0.0
        %1156 = vmatpush1.msra.mxu0 0.0
        %1157 = vmatprep.subr.mxu0 0.0
        %1158 = vmatpush1.msra.mxu0 0.0
        %1159 = vmatprep.subr.mxu0 0.0
        %1160 = vmatpush1.msra.mxu0 0.0
        %1161 = vmatprep.subr.mxu0 0.0
        %1162 = vmatpush1.msra.mxu0 0.0
        %1163 = vmatprep.subr.mxu0 0.0
        %1164 = vmatpush1.msra.mxu0 0.0
        %1165 = vmatprep.subr.mxu0 0.0
        %1166 = vmatpush1.msra.mxu0 0.0
        %1167 = vmatprep.subr.mxu0 0.0
        %1168 = vmatpush1.msra.mxu0 0.0
        %1169 = vmatprep.subr.mxu0 0.0
        %1170 = vmatpush1.msra.mxu0 0.0
        %1171 = vmatprep.subr.mxu0 0.0
        %1172 = vmatpush1.msra.mxu0 0.0
        %1173 = vmatprep.subr.mxu0 0.0
        %1174 = vmatpush1.msra.mxu0 0.0
        %1175 = vmatprep.subr.mxu0 0.0
        %1176 = vmatpush1.msra.mxu0 0.0
        %1177 = vmatprep.subr.mxu0 0.0
        %1178 = vmatpush1.msra.mxu0 0.0
        %1179 = vmatprep.subr.mxu0 0.0
        %1180 = vmatpush1.msra.mxu0 0.0
        %1181 = vmatprep.subr.mxu0 0.0
        %1182 = vmatpush1.msra.mxu0 %v937
        %1183 = vmatprep.subr.mxu0 0.0
        %1184 = vmatpush1.msra.mxu0 %v936
        %1185 = vmatprep.subr.mxu0 0.0
        %1186 = vmatpush2.msra.mxu0 0.0
        %1187 = vmatprep.subr.mxu0 0.0
        %1188 = vmatpush2.msra.mxu0 0.0
        %1189 = vmatprep.subr.mxu0 0.0
        %1190 = vmatpush2.msra.mxu0 0.0
        %1191 = vmatprep.subr.mxu0 0.0
        %1192 = vmatpush2.msra.mxu0 0.0
        %1193 = vmatprep.subr.mxu0 0.0
        %1194 = vmatpush2.msra.mxu0 0.0
        %1195 = vmatprep.subr.mxu0 0.0
        %1196 = vmatpush2.msra.mxu0 0.0
        %1197 = vmatprep.subr.mxu0 0.0
        %1198 = vmatpush2.msra.mxu0 0.0
        %1199 = vmatprep.subr.mxu0 0.0
        %1200 = vmatpush2.msra.mxu0 0.0
        %1201 = vmatprep.subr.mxu0 0.0
        %1202 = vmatpush2.msra.mxu0 0.0
        %1203 = vmatprep.subr.mxu0 0.0
        %1204 = vmatpush2.msra.mxu0 0.0
        %1205 = vmatprep.subr.mxu0 0.0
        %1206 = vmatpush2.msra.mxu0 0.0
        %1207 = vmatprep.subr.mxu0 0.0
        %1208 = vmatpush2.msra.mxu0 0.0
        %1209 = vmatprep.subr.mxu0 0.0
        %1210 = vmatpush2.msra.mxu0 0.0
        %1211 = vmatprep.subr.mxu0 0.0
        %1212 = vmatpush2.msra.mxu0 0.0
        %1213 = vmatprep.subr.mxu0 0.0
        %1214 = vmatpush2.msra.mxu0 0.0
        %1215 = vmatprep.subr.mxu0 0.0
        %1216 = vmatpush2.msra.mxu0 0.0
        %1217 = vmatprep.mubr.f32.mxu0 0.0
        %1218 = vmatmul.mubr.f32.gmra.mxu0 %v1151
        %v1219 = vpop.f32.mrf.mxu0
        %v1220 = vadd.f32 0.0, %v1219
        %v1221 = vpop.f32.mrf.mxu0
        %1222 = vdwg.mxu0
        %v1223 = vld [vmem:[#allocation4] sm:$0xff]
        %v1224 = vld [vmem:[%s656] sm:$0xff]
        %v1226 = vsel %vm1058, %v1220, 0
        %1228 = vmatprep.subr.mxu0 0.0
        %1229 = vmatpush1.msra.mxu0 0.0
        %1230 = vmatprep.subr.mxu0 0.0
        %1231 = vmatpush1.msra.mxu0 0.0
        %1232 = vmatprep.subr.mxu0 0.0
        %1233 = vmatpush1.msra.mxu0 0.0
        %1234 = vmatprep.subr.mxu0 0.0
        %1235 = vmatpush1.msra.mxu0 0.0
        %1236 = vmatprep.subr.mxu0 0.0
        %1237 = vmatpush1.msra.mxu0 0.0
        %1238 = vmatprep.subr.mxu0 0.0
        %1239 = vmatpush1.msra.mxu0 0.0
        %1240 = vmatprep.subr.mxu0 0.0
        %1241 = vmatpush1.msra.mxu0 0.0
        %1242 = vmatprep.subr.mxu0 0.0
        %1243 = vmatpush1.msra.mxu0 0.0
        %1244 = vmatprep.subr.mxu0 0.0
        %1245 = vmatpush1.msra.mxu0 0.0
        %1246 = vmatprep.subr.mxu0 0.0
        %1247 = vmatpush1.msra.mxu0 0.0
        %1248 = vmatprep.subr.mxu0 0.0
        %1249 = vmatpush1.msra.mxu0 0.0
        %1250 = vmatprep.subr.mxu0 0.0
        %1251 = vmatpush1.msra.mxu0 0.0
        %1252 = vmatprep.subr.mxu0 0.0
        %1253 = vmatpush1.msra.mxu0 0.0
        %1254 = vmatprep.subr.mxu0 0.0
        %1255 = vmatpush1.msra.mxu0 0.0
        %1256 = vmatprep.subr.mxu0 0.0
        %1257 = vmatpush1.msra.mxu0 0.0
        %1258 = vmatprep.subr.mxu0 0.0
        %1259 = vmatpush1.msra.mxu0 %v1224
        %1260 = vmatprep.subr.mxu0 0.0
        %1261 = vmatpush2.msra.mxu0 0.0
        %1262 = vmatprep.subr.mxu0 0.0
        %1263 = vmatpush2.msra.mxu0 0.0
        %1264 = vmatprep.subr.mxu0 0.0
        %1265 = vmatpush2.msra.mxu0 0.0
        %1266 = vmatprep.subr.mxu0 0.0
        %1267 = vmatpush2.msra.mxu0 0.0
        %1268 = vmatprep.subr.mxu0 0.0
        %1269 = vmatpush2.msra.mxu0 0.0
        %1270 = vmatprep.subr.mxu0 0.0
        %1271 = vmatpush2.msra.mxu0 0.0
        %1272 = vmatprep.subr.mxu0 0.0
        %1273 = vmatpush2.msra.mxu0 0.0
        %1274 = vmatprep.subr.mxu0 0.0
        %1275 = vmatpush2.msra.mxu0 0.0
        %1276 = vmatprep.subr.mxu0 0.0
        %1277 = vmatpush2.msra.mxu0 0.0
        %1278 = vmatprep.subr.mxu0 0.0
        %1279 = vmatpush2.msra.mxu0 0.0
        %1280 = vmatprep.subr.mxu0 0.0
        %1281 = vmatpush2.msra.mxu0 0.0
        %1282 = vmatprep.subr.mxu0 0.0
        %1283 = vmatpush2.msra.mxu0 0.0
        %1284 = vmatprep.subr.mxu0 0.0
        %1285 = vmatpush2.msra.mxu0 0.0
        %1286 = vmatprep.subr.mxu0 0.0
        %1287 = vmatpush2.msra.mxu0 0.0
        %1288 = vmatprep.subr.mxu0 0.0
        %1289 = vmatpush2.msra.mxu0 0.0
        %1290 = vmatprep.subr.mxu0 0.0
        %1291 = vmatpush2.msra.mxu0 0.0
        %1292 = vmatprep.mubr.f32.mxu0 0.0
        %1293 = vmatmul.mubr.f32.gmra.mxu0 %v1226
        %v1294 = vpop.f32.mrf.mxu0
        %v1295 = vadd.f32 0.0, %v1294
        %v1296 = vpop.f32.mrf.mxu0
        %1297 = vdwg.mxu0
        %v1298 = vadd.f32 %v1223, %v1295
        %1299 = vst.msk [vmem:[#allocation4] sm:$0xff] %vm938, %v1298
        %p1300 = scmp.eq.s32.totalorder %s33, 3
        // Predicated region
        $region149: #{tpu_custom_call.1} parent=131 // pred_check
          %p1301 = pneg %p1300
        $region150: #{tpu_custom_call.1} parent=131 // pred_check_branch
          %1303 = sbr.rel (%p1301) target = $region152
        $region151: #{tpu_custom_call.1} parent=131 // pred_region
          %v1304 = vld [vmem:[#allocation4] sm:$0xff]
          %v1305 = vadd.f32 %v657, %v1304
          %v1306 = vld [vmem:[%s7] sm:$0x1]
          %v1308 = vlaneseq
          %v1309 = vshrl.u32 %v1308, 7
          %v1310 = vsub.s32 0, %v1309
          %v1311 = vrot.slane %v1306, %v1310
          %v1313 = vadd.f32 %v1305, %v1311
          %v1314 = vsel %vm938, %v1313, 0.0
          %1315 = vadd.xlane.f32.xlu0 %v1314
          %v1316 = vpop.xlane.xlu0 %1315
          %v1317 = vmul.f32 %v1313, %v1313
          %v1318 = vsel %vm938, %v1317, 0.0
          %1319 = vadd.xlane.f32.xlu0 %v1318
          %v1320 = vpop.xlane.xlu0 %1319
          %v1321 = vmul.f32 %v1316, 0.03125
          %v1322 = vmul.f32 %v1316, %v1321
          %v1323 = vsub.f32 %v1320, %v1322
          %v1324 = vmul.f32 %v1323, 0.032258064
          %v1325 = vmax.f32 %v1324, 0.0
          %v1326 = vrsqrt.pop %v1325
          %v1327 = vmul.f32 %v1325, %v1326
          %vm1328 = vcmp.eq.f32.partialorder %v1325, inf
          %v1329 = vsel %vm1328, %v1325, %v1327
          %vm1330 = vcmp.eq.f32.partialorder %v1325, 0.0
          %v1331 = vand.u32 %v1325, 2147483648
          %v1332 = vsel %vm1330, %v1331, %v1329
          %v1333 = vadd.f32 %v1332, 1e-06
          %v1334 = vrcp.pop %v1333
          %v1335 = vmul.f32 1.0, %v1334
          %v1336 = vsub.f32 %v1313, %v1321
          %v1337 = vmul.f32 %v1336, %v1335
          %v1338 = vlaneseq
          %v1339 = vshrl.u32 %v1338, 7
          %v1340 = vsub.s32 0, %v1339
          %v1341 = vrot.slane %v661, %v1340
          %v1342 = vmul.f32 %v1341, %v1337
          %v1343 = vlaneseq
          %v1344 = vshrl.u32 %v1343, 7
          %v1345 = vsub.s32 0, %v1344
          %v1346 = vrot.slane %v662, %v1345
          %v1347 = vadd.f32 %v1342, %v1346
          %v1348 = vld [vmem:[%s8] sm:$0xff]
          %v1349 = vld [vmem:[%s8 + $0x8] sm:$0xff]
          %v1350 = vld [vmem:[%s8 + $0x10] sm:$0xff]
          %v1351 = vld [vmem:[%s8 + $0x18] sm:$0xff]
          %v1352 = vld [vmem:[%s9] sm:$0x1]
          %v1354 = vlaneseq
          %v1355 = vshrl.u32 %v1354, 7
          %v1356 = vsub.s32 0, %v1355
          %v1357 = vrot.slane %v1352, %v1356
          %v1360 = vsel %vm938, %v1347, 0
          %1362 = vmatprep.subr.mxu0 0.0
          %1363 = vmatpush1.msra.mxu0 0.0
          %1364 = vmatprep.subr.mxu0 0.0
          %1365 = vmatpush1.msra.mxu0 0.0
          %1366 = vmatprep.subr.mxu0 0.0
          %1367 = vmatpush1.msra.mxu0 0.0
          %1368 = vmatprep.subr.mxu0 0.0
          %1369 = vmatpush1.msra.mxu0 0.0
          %1370 = vmatprep.subr.mxu0 0.0
          %1371 = vmatpush1.msra.mxu0 0.0
          %1372 = vmatprep.subr.mxu0 0.0
          %1373 = vmatpush1.msra.mxu0 0.0
          %1374 = vmatprep.subr.mxu0 0.0
          %1375 = vmatpush1.msra.mxu0 0.0
          %1376 = vmatprep.subr.mxu0 0.0
          %1377 = vmatpush1.msra.mxu0 0.0
          %1378 = vmatprep.subr.mxu0 0.0
          %1379 = vmatpush1.msra.mxu0 0.0
          %1380 = vmatprep.subr.mxu0 0.0
          %1381 = vmatpush1.msra.mxu0 0.0
          %1382 = vmatprep.subr.mxu0 0.0
          %1383 = vmatpush1.msra.mxu0 0.0
          %1384 = vmatprep.subr.mxu0 0.0
          %1385 = vmatpush1.msra.mxu0 0.0
          %1386 = vmatprep.subr.mxu0 0.0
          %1387 = vmatpush1.msra.mxu0 %v1351
          %1388 = vmatprep.subr.mxu0 0.0
          %1389 = vmatpush1.msra.mxu0 %v1350
          %1390 = vmatprep.subr.mxu0 0.0
          %1391 = vmatpush1.msra.mxu0 %v1349
          %1392 = vmatprep.subr.mxu0 0.0
          %1393 = vmatpush1.msra.mxu0 %v1348
          %1394 = vmatprep.subr.mxu0 0.0
          %1395 = vmatpush2.msra.mxu0 0.0
          %1396 = vmatprep.subr.mxu0 0.0
          %1397 = vmatpush2.msra.mxu0 0.0
          %1398 = vmatprep.subr.mxu0 0.0
          %1399 = vmatpush2.msra.mxu0 0.0
          %1400 = vmatprep.subr.mxu0 0.0
          %1401 = vmatpush2.msra.mxu0 0.0
          %1402 = vmatprep.subr.mxu0 0.0
          %1403 = vmatpush2.msra.mxu0 0.0
          %1404 = vmatprep.subr.mxu0 0.0
          %1405 = vmatpush2.msra.mxu0 0.0
          %1406 = vmatprep.subr.mxu0 0.0
          %1407 = vmatpush2.msra.mxu0 0.0
          %1408 = vmatprep.subr.mxu0 0.0
          %1409 = vmatpush2.msra.mxu0 0.0
          %1410 = vmatprep.subr.mxu0 0.0
          %1411 = vmatpush2.msra.mxu0 0.0
          %1412 = vmatprep.subr.mxu0 0.0
          %1413 = vmatpush2.msra.mxu0 0.0
          %1414 = vmatprep.subr.mxu0 0.0
          %1415 = vmatpush2.msra.mxu0 0.0
          %1416 = vmatprep.subr.mxu0 0.0
          %1417 = vmatpush2.msra.mxu0 0.0
          %1418 = vmatprep.subr.mxu0 0.0
          %1419 = vmatpush2.msra.mxu0 0.0
          %1420 = vmatprep.subr.mxu0 0.0
          %1421 = vmatpush2.msra.mxu0 0.0
          %1422 = vmatprep.subr.mxu0 0.0
          %1423 = vmatpush2.msra.mxu0 0.0
          %1424 = vmatprep.subr.mxu0 0.0
          %1425 = vmatpush2.msra.mxu0 0.0
          %1426 = vmatprep.mubr.f32.mxu0 0.0
          %1427 = vmatmul.mubr.f32.gmra.mxu0 %v1360
          %v1428 = vpop.f32.mrf.mxu0
          %v1429 = vadd.f32 %v1357, %v1428
          %v1430 = vpop.f32.mrf.mxu0
          %1431 = vdwg.mxu0
          %v1432 = vmax.f32 %v1429, 0.0
          %v1433 = vld [vmem:[%s10] sm:$0xff]
          %v1434 = vld [vmem:[%s10 + $0x8] sm:$0xff]
          %v1435 = vld [vmem:[%s10 + $0x10] sm:$0xff]
          %v1436 = vld [vmem:[%s10 + $0x18] sm:$0xff]
          %v1437 = vld [vmem:[%s10 + $0x20] sm:$0xff]
          %v1438 = vld [vmem:[%s10 + $0x28] sm:$0xff]
          %v1439 = vld [vmem:[%s10 + $0x30] sm:$0xff]
          %v1440 = vld [vmem:[%s10 + $0x38] sm:$0xff]
          %v1441 = vld [vmem:[%s11] sm:$0x1]
          %v1443 = vlaneseq
          %v1444 = vshrl.u32 %v1443, 7
          %v1445 = vsub.s32 0, %v1444
          %v1446 = vrot.slane %v1441, %v1445
          %vm1448 = vcmask 523264
          %v1450 = vsel %vm1448, %v1432, 0
          %1452 = vmatprep.subr.mxu0 0.0
          %1453 = vmatpush1.msra.mxu0 0.0
          %1454 = vmatprep.subr.mxu0 0.0
          %1455 = vmatpush1.msra.mxu0 0.0
          %1456 = vmatprep.subr.mxu0 0.0
          %1457 = vmatpush1.msra.mxu0 0.0
          %1458 = vmatprep.subr.mxu0 0.0
          %1459 = vmatpush1.msra.mxu0 0.0
          %1460 = vmatprep.subr.mxu0 0.0
          %1461 = vmatpush1.msra.mxu0 0.0
          %1462 = vmatprep.subr.mxu0 0.0
          %1463 = vmatpush1.msra.mxu0 0.0
          %1464 = vmatprep.subr.mxu0 0.0
          %1465 = vmatpush1.msra.mxu0 0.0
          %1466 = vmatprep.subr.mxu0 0.0
          %1467 = vmatpush1.msra.mxu0 0.0
          %1468 = vmatprep.subr.mxu0 0.0
          %1469 = vmatpush1.msra.mxu0 %v1440
          %1470 = vmatprep.subr.mxu0 0.0
          %1471 = vmatpush1.msra.mxu0 %v1439
          %1472 = vmatprep.subr.mxu0 0.0
          %1473 = vmatpush1.msra.mxu0 %v1438
          %1474 = vmatprep.subr.mxu0 0.0
          %1475 = vmatpush1.msra.mxu0 %v1437
          %1476 = vmatprep.subr.mxu0 0.0
          %1477 = vmatpush1.msra.mxu0 %v1436
          %1478 = vmatprep.subr.mxu0 0.0
          %1479 = vmatpush1.msra.mxu0 %v1435
          %1480 = vmatprep.subr.mxu0 0.0
          %1481 = vmatpush1.msra.mxu0 %v1434
          %1482 = vmatprep.subr.mxu0 0.0
          %1483 = vmatpush1.msra.mxu0 %v1433
          %1484 = vmatprep.subr.mxu0 0.0
          %1485 = vmatpush2.msra.mxu0 0.0
          %1486 = vmatprep.subr.mxu0 0.0
          %1487 = vmatpush2.msra.mxu0 0.0
          %1488 = vmatprep.subr.mxu0 0.0
          %1489 = vmatpush2.msra.mxu0 0.0
          %1490 = vmatprep.subr.mxu0 0.0
          %1491 = vmatpush2.msra.mxu0 0.0
          %1492 = vmatprep.subr.mxu0 0.0
          %1493 = vmatpush2.msra.mxu0 0.0
          %1494 = vmatprep.subr.mxu0 0.0
          %1495 = vmatpush2.msra.mxu0 0.0
          %1496 = vmatprep.subr.mxu0 0.0
          %1497 = vmatpush2.msra.mxu0 0.0
          %1498 = vmatprep.subr.mxu0 0.0
          %1499 = vmatpush2.msra.mxu0 0.0
          %1500 = vmatprep.subr.mxu0 0.0
          %1501 = vmatpush2.msra.mxu0 0.0
          %1502 = vmatprep.subr.mxu0 0.0
          %1503 = vmatpush2.msra.mxu0 0.0
          %1504 = vmatprep.subr.mxu0 0.0
          %1505 = vmatpush2.msra.mxu0 0.0
          %1506 = vmatprep.subr.mxu0 0.0
          %1507 = vmatpush2.msra.mxu0 0.0
          %1508 = vmatprep.subr.mxu0 0.0
          %1509 = vmatpush2.msra.mxu0 0.0
          %1510 = vmatprep.subr.mxu0 0.0
          %1511 = vmatpush2.msra.mxu0 0.0
          %1512 = vmatprep.subr.mxu0 0.0
          %1513 = vmatpush2.msra.mxu0 0.0
          %1514 = vmatprep.subr.mxu0 0.0
          %1515 = vmatpush2.msra.mxu0 0.0
          %1516 = vmatprep.mubr.f32.mxu0 0.0
          %1517 = vmatmul.mubr.f32.gmra.mxu0 %v1450
          %v1518 = vpop.f32.mrf.mxu0
          %v1519 = vadd.f32 %v1446, %v1518
          %v1520 = vpop.f32.mrf.mxu0
          %1521 = vdwg.mxu0
          %v1522 = vadd.f32 %v1313, %v1519
          %1523 = vst.msk [vmem:[%s636] sm:$0xff] %vm938, %v1522
        $region152: #{tpu_custom_call.1} parent=131 // pred_fallthru
          _
        %s1524 = sand.u32 %s339, 1
        %s1525 = scalar_lea.sflag [#allocation8], %s1524
        %s1526 = sand.u32 %s339, 1
        %s1527 = smul.addr %s1526, 8
        %s1528 = scalar_lea.vmem [#allocation7], %s1527
        // Predicated region
        $region153: #{tpu_custom_call.1} parent=131 // pred_check
          %p1529 = pneg %p349
        $region154: #{tpu_custom_call.1} parent=131 // pred_check_branch
          %1531 = sbr.rel (%p1529) target = $region156
        $region155: #{tpu_custom_call.1} parent=131 // pred_region
          %s1533 = ssub.s32 128, 128
          %1534 = vsyncadd %s1525, %s1533
          %s1535 = smul.addr %s31, 2
          %s1536 = sadd.s32 %s32, %s1535
          %s1537 = smul.addr %s1536, 128
          %s1538 = scalar_lea.hbm %s12, %s1537
          %s1540 = sshll.u32 %s1528, 4
          %s1541 = int_to_ptr.vmem [resolvable:$true] %s1540
          %1543 = dma.vmem_to_hbm [thread:$0]  %s1541, 128, %s1538, %s1525
        $region156: #{tpu_custom_call.1} parent=131 // pred_fallthru
          _
      $region132: #{tpu_custom_call.1} parent=5 // pred_fallthru
        _
      %p1544 = scmp.le.s32.totalorder 2, %s21
      // Predicated region
      $region157: #{tpu_custom_call.1} parent=5 // pred_check
        %p1545 = pneg %p1544
      $region158: #{tpu_custom_call.1} parent=5 // pred_check_branch
        %1547 = sbr.rel (%p1545) target = $region160
      $region159: #{tpu_custom_call.1} parent=5 // pred_region
        %s1548 = ssub.s32 %s21, 2
        // Predicated region
        $region161: #{tpu_custom_call.1} parent=159 // pred_check
          %p1549 = pneg %p355
        $region162: #{tpu_custom_call.1} parent=159 // pred_check_branch
          %1551 = sbr.rel (%p1549) target = $region164
        $region163: #{tpu_custom_call.1} parent=159 // pred_region
          %s1552 = sand.u32 %s340, 1
          %s1553 = scalar_lea.sflag [#allocation8], %s1552
          %s1554 = sand.u32 %s340, 1
          %s1555 = smul.addr %s1554, 8
          %s1556 = scalar_lea.vmem [#allocation7], %s1555
          %1557 = dma.done %s1553, 128
        $region164: #{tpu_custom_call.1} parent=159 // pred_fallthru
          _
      $region160: #{tpu_custom_call.1} parent=5 // pred_fallthru
        _
    $region6: #{tpu_custom_call.1} parent=1 // loop_footer
      %s25 = sadd.s32 1, %s21
    $region7: #{tpu_custom_call.1} parent=1 // loop_footer_branch
      %20 = sbr.rel target = $region3
    $region8: #{tpu_custom_call.1} parent=1 // loop_exit
      _
    %1558 = vsyncpa [#allocation8], 1
    %s1559 = scalar_lea.sflag [#allocation8], 1
    %1560 = vsyncpa %s1559, 1

</llo_original>
